<compile_context>
chip_gen: v6e
topology: v6e:2x2x1
jax: 0.10.0
libtpu: 0.0.40
codegen_flags: <defaults>
</compile_context>

<pallas_src>
import functools

import jax
import jax.numpy as jnp
from jax.experimental import pallas as pl
from jax.experimental.pallas import tpu as pltpu


def _round_up(x, m):
    return (x + m - 1) // m * m


# ----------------------------------------------------------------------------
# Kernels
# ----------------------------------------------------------------------------
def _ffn_kernel_resident(x_ref, gamma_ref, beta_ref, w1_ref, b1_ref, w2_ref,
                         b2_ref, o_ref, *, eps):
    # x block: (TR, d_model). Element-wise math in f32 (VPU); matmul operands are
    # fed to the MXU in the weight dtype (bf16 on v6e/v7x).
    x = x_ref[...].astype(jnp.float32)

    # --- LayerNorm over d_model (eps=1e-6), one-pass moments ---
    mean = jnp.mean(x, axis=-1, keepdims=True)
    var = jnp.maximum(jnp.mean(x * x, axis=-1, keepdims=True) - mean * mean, 0.0)
    xn = ((x - mean) * jax.lax.rsqrt(var + eps)
          * gamma_ref[...].astype(jnp.float32)
          + beta_ref[...].astype(jnp.float32))

    # --- w_1 (d_model -> d_ff): fused bias + ReLU + downcast to MXU dtype ---
    h = jnp.dot(xn.astype(w1_ref.dtype), w1_ref[...],
                preferred_element_type=jnp.float32)
    h = jnp.maximum(h + b1_ref[...].astype(jnp.float32), 0.0).astype(w2_ref.dtype)
    # TODO(synk): dropout_1 is identity in eval mode (no RNG mask applied).

    # --- w_2 (d_ff -> d_model) + bias ---
    out = jnp.dot(h, w2_ref[...], preferred_element_type=jnp.float32)
    out = out + b2_ref[...].astype(jnp.float32)
    # TODO(synk): dropout_2 is identity in eval mode (no RNG mask applied).

    # Residual: re-read x so its f32 copy is not live across both matmuls.
    o_ref[...] = (out + x_ref[...].astype(jnp.float32)).astype(o_ref.dtype)


def _ffn_kernel_fftiled(x_ref, gamma_ref, beta_ref, w1_ref, b1_ref, w2_ref,
                        b2_ref, o_ref, xn_ref, acc_ref, *, eps):
    # grid = (row tiles [parallel], d_ff tiles [arbitrary]).
    j = pl.program_id(1)

    @pl.when(j == 0)
    def _():
        x = x_ref[...].astype(jnp.float32)
        mean = jnp.mean(x, axis=-1, keepdims=True)
        var = jnp.maximum(jnp.mean(x * x, axis=-1, keepdims=True) - mean * mean,
                          0.0)
        xn = ((x - mean) * jax.lax.rsqrt(var + eps)
              * gamma_ref[...].astype(jnp.float32)
              + beta_ref[...].astype(jnp.float32))
        xn_ref[...] = xn.astype(xn_ref.dtype)
        acc_ref[...] = jnp.zeros_like(acc_ref)

    # ReLU is elementwise, so chunking over d_ff is exact.
    h = jnp.dot(xn_ref[...], w1_ref[...], preferred_element_type=jnp.float32)
    h = jnp.maximum(h + b1_ref[...].astype(jnp.float32), 0.0).astype(w2_ref.dtype)
    # TODO(synk): dropout_1 / dropout_2 are identity in eval mode.
    acc_ref[...] += jnp.dot(h, w2_ref[...], preferred_element_type=jnp.float32)

    @pl.when(j == pl.num_programs(1) - 1)
    def _():
        out = (acc_ref[...] + b2_ref[...].astype(jnp.float32)
               + x_ref[...].astype(jnp.float32))
        o_ref[...] = out.astype(o_ref.dtype)


# ----------------------------------------------------------------------------
# pallas_call wrappers
# ----------------------------------------------------------------------------
def _ffn_call_resident(x2d, gamma2d, beta2d, w1, b1_2d, w2, b2_2d, *,
                       tr, eps, vmem_limit):
    n_pad, d_model = x2d.shape

    def whole():  # whole-array, single-buffered VMEM resident (loaded once)
        return pl.BlockSpec(memory_space=pltpu.MemorySpace.VMEM)

    return pl.pallas_call(
        functools.partial(_ffn_kernel_resident, eps=eps),
        out_shape=jax.ShapeDtypeStruct((n_pad, d_model), x2d.dtype),
        grid_spec=pltpu.PrefetchScalarGridSpec(
            num_scalar_prefetch=0,
            grid=(n_pad // tr,),
            in_specs=[
                pl.BlockSpec((tr, d_model), lambda i: (i, 0)),   # x row tile
                whole(),                                         # gamma
                whole(),                                         # beta
                whole(),                                         # w1
                whole(),                                         # b1
                whole(),                                         # w2
                whole(),                                         # b2
            ],
            out_specs=pl.BlockSpec((tr, d_model), lambda i: (i, 0)),
        ),
        compiler_params=pltpu.CompilerParams(
            dimension_semantics=("parallel",),
            vmem_limit_bytes=vmem_limit),
    )(x2d, gamma2d, beta2d, w1, b1_2d, w2, b2_2d)


def _ffn_call_fftiled(x2d, gamma2d, beta2d, w1, b1_2d, w2, b2_2d, *,
                      tr, tf, eps, vmem_limit):
    n_pad, d_model = x2d.shape
    d_ff = w1.shape[1]
    return pl.pallas_call(
        functools.partial(_ffn_kernel_fftiled, eps=eps),
        out_shape=jax.ShapeDtypeStruct((n_pad, d_model), x2d.dtype),
        grid_spec=pltpu.PrefetchScalarGridSpec(
            num_scalar_prefetch=0,
            grid=(n_pad // tr, d_ff // tf),
            in_specs=[
                pl.BlockSpec((tr, d_model), lambda i, j: (i, 0)),   # x row tile
                pl.BlockSpec((1, d_model), lambda i, j: (0, 0)),    # gamma
                pl.BlockSpec((1, d_model), lambda i, j: (0, 0)),    # beta
                pl.BlockSpec((d_model, tf), lambda i, j: (0, j)),   # w1 col block
                pl.BlockSpec((1, tf), lambda i, j: (0, j)),         # b1 block
                pl.BlockSpec((tf, d_model), lambda i, j: (j, 0)),   # w2 row block
                pl.BlockSpec((1, d_model), lambda i, j: (0, 0)),    # b2
            ],
            out_specs=pl.BlockSpec((tr, d_model), lambda i, j: (i, 0)),
            scratch_shapes=[
                pltpu.VMEM((tr, d_model), w1.dtype),      # normalized x (MXU dtype)
                pltpu.VMEM((tr, d_model), jnp.float32),   # f32 accumulator
            ],
        ),
        compiler_params=pltpu.CompilerParams(
            dimension_semantics=("parallel", "arbitrary"),
            vmem_limit_bytes=vmem_limit),
    )(x2d, gamma2d, beta2d, w1, b1_2d, w2, b2_2d)


# ----------------------------------------------------------------------------
# Sizing heuristics
# ----------------------------------------------------------------------------
def _vmem_budget_bytes():
    """Generation-aware usable-VMEM budget."""
    cap = 128 << 20
    try:  # narrow: hardware-info query only
        info = pltpu.get_tpu_info()
        cap = int(getattr(info, "vmem_capacity_bytes", cap))
    except Exception:
        pass
    if cap <= (64 << 20):
        # v7x-class (64 MiB / TC): leave headroom for Mosaic scratch + pipeline.
        return min(52 << 20, max(cap - (12 << 20), cap * 3 // 4))
    # v5e/v6e: 128 MiB physical -> allow big row tiles / resident weights.
    return min(104 << 20, cap - (24 << 20))


def _choose_row_tiling(n_rows, tile_rows):
    # Largest tile <= tile_rows (multiple of 8 sublanes), with an even number of
    # row tiles (>= 2) so the "parallel" grid axis shards evenly over v7x's 2 TCs.
    max_tr = _round_up(min(int(tile_rows), max(n_rows, 8)), 8)
    n_tiles = max(2, pl.cdiv(n_rows, max_tr))
    if n_tiles % 2:
        n_tiles += 1
    tr = _round_up(pl.cdiv(n_rows, n_tiles), 8)
    return tr, tr * n_tiles


def _est_resident(d_model, d_ff, tr, w_item, x_item, p_item):
    return ((2 * d_model * d_ff) * w_item          # w1 + w2, single-buffered
            + (3 * d_model + d_ff) * p_item        # gamma/beta/b1/b2
            + 4 * tr * d_model * x_item            # x/out tiles, double-buffered
            + tr * d_ff * (4 + w_item)             # h (f32) + downcast copy
            + 3 * tr * d_model * 4)                # f32 LayerNorm temporaries


def _est_fftiled(d_model, tf, tr, w_item, x_item, p_item):
    return (4 * d_model * tf * w_item              # w1/w2 blocks, double-buffered
            + 2 * tf * p_item + 6 * d_model * p_item
            + 4 * tr * d_model * x_item            # x/out tiles, double-buffered
            + tr * d_model * (w_item + 4)          # xn scratch + f32 accumulator
            + tr * tf * (4 + w_item)               # per-chunk h
            + 2 * tr * d_model * 4)                # misc f32 temporaries


def _auto_ff_tile(d_ff, d_model, tr, w_item, x_item, p_item, budget):
    splits = 1
    while d_ff // splits >= 128:
        if d_ff % splits == 0:
            tf = d_ff // splits
            if (tf == d_ff or tf % 128 == 0) and \
               _est_fftiled(d_model, tf, tr, w_item, x_item, p_item) <= budget:
                return tf
        splits *= 2
    return 128 if d_ff % 128 == 0 else d_ff


# ----------------------------------------------------------------------------
# Public wrapper
# ----------------------------------------------------------------------------
def positionwise_feed_forward(x, gamma, beta, w1, b1, w2, b2, *,
                              eps=1e-6, tile_rows=1024,
                              mxu_dtype=jnp.bfloat16, ff_tile=None):
    """x: (B, L, d_model) -> (B, L, d_model).

    Weights are stored (in_features, out_features) so the kernel computes
    x @ W + b (== PyTorch's x @ W.T with W of shape (out, in)).
    Output dtype == input dtype (pass bf16 activations for bf16 I/O).
    """
    B, L, d_model = x.shape
    d_ff = w1.shape[1]
    N = B * L

    tr, n_pad = _choose_row_tiling(N, tile_rows)
    x2d = x.reshape(N, d_model)
    if n_pad != N:
        x2d = jnp.pad(x2d, ((0, n_pad - N), (0, 0)))  # zero rows, sliced off below

    # MXU operands in bf16 (v6e/v7x) while VPU math stays f32 inside the kernel.
    w_dtype = x.dtype if mxu_dtype is None else jnp.dtype(mxu_dtype)
    w1c = w1.astype(w_dtype)
    w2c = w2.astype(w_dtype)
    gamma2d = gamma.reshape(1, d_model)
    beta2d = beta.reshape(1, d_model)
    b1_2d = b1.reshape(1, d_ff)
    b2_2d = b2.reshape(1, d_model)

    x_item = jnp.dtype(x.dtype).itemsize
    w_item = jnp.dtype(w_dtype).itemsize
    p_item = jnp.dtype(gamma.dtype).itemsize

    budget = _vmem_budget_bytes()
    est_res = _est_resident(d_model, d_ff, tr, w_item, x_item, p_item)
    args = (x2d, gamma2d, beta2d, w1c, b1_2d, w2c, b2_2d)

    # Deterministic path selection (no exception-driven fallback).
    if ff_tile is None and est_res <= budget:
        vmem_limit = int(min(budget, max(32 << 20, est_res * 3 // 2)))
        out2d = _ffn_call_resident(*args, tr=tr, eps=eps, vmem_limit=vmem_limit)
    else:
        tf = int(ff_tile) if ff_tile is not None else _auto_ff_tile(
            d_ff, d_model, tr, w_item, x_item, p_item, budget)
        if d_ff % tf != 0 or (tf != d_ff and tf % 128 != 0):
            raise ValueError(f"ff_tile={tf} must divide d_ff={d_ff} and be a "
                             f"multiple of 128 (or equal d_ff)")
        est = _est_fftiled(d_model, tf, tr, w_item, x_item, p_item)
        vmem_limit = int(min(budget, max(32 << 20, est * 3 // 2)))
        out2d = _ffn_call_fftiled(*args, tr=tr, tf=tf, eps=eps,
                                  vmem_limit=vmem_limit)

    if n_pad != N:
        out2d = out2d[:N]
    return out2d.reshape(B, L, d_model)


# ----------------------------------------------------------------------------
# Reference / demo
# ----------------------------------------------------------------------------
def _init_params(key, d_model, d_ff, dtype=jnp.float32):
    """Deterministic init mimicking nn.Linear / nn.LayerNorm defaults."""
    k1, k2, k3, k4 = jax.random.split(key, 4)
    bound1 = 1.0 / (d_model ** 0.5)
    bound2 = 1.0 / (d_ff ** 0.5)
    w1 = jax.random.uniform(k1, (d_model, d_ff), dtype, -bound1, bound1)
    b1 = jax.random.uniform(k2, (d_ff,), dtype, -bound1, bound1)
    w2 = jax.random.uniform(k3, (d_ff, d_model), dtype, -bound2, bound2)
    b2 = jax.random.uniform(k4, (d_model,), dtype, -bound2, bound2)
    gamma = jnp.ones((d_model,), dtype)
    beta = jnp.zeros((d_model,), dtype)
    return gamma, beta, w1, b1, w2, b2


def _reference(x, gamma, beta, w1, b1, w2, b2, eps=1e-6):
    x = x.astype(jnp.float32)
    mean = jnp.mean(x, axis=-1, keepdims=True)
    var = jnp.mean((x - mean) ** 2, axis=-1, keepdims=True)
    xn = (x - mean) * jax.lax.rsqrt(var + eps) * gamma + beta
    hp = jax.lax.Precision.HIGHEST
    h = jnp.maximum(jnp.dot(xn, w1, precision=hp) + b1, 0.0)
    return jnp.dot(h, w2, precision=hp) + b2 + x


if __name__ == "__main__":
    B, L, d_model, d_ff = 2, 256, 128, 512   # lane-aligned (multiples of 128)
    key = jax.random.PRNGKey(0)
    kx, kp = jax.random.split(key)
    x = jax.random.normal(kx, (B, L, d_model), jnp.float32)
    params = _init_params(kp, d_model, d_ff)

    # 1) Resident-weight path, f32 I/O, bf16 MXU (grid = 2 even row tiles).
    out = positionwise_feed_forward(x, *params)
    out = jax.block_until_ready(out)
    ref = _reference(x, *params)
    assert out.shape == (B, L, d_model)
    assert jnp.allclose(out, ref, atol=5e-2, rtol=5e-2), "bf16-MXU mismatch"

    # 2) bf16 activation I/O (halves HBM traffic; no wrapper cast needed here
    #    because the input itself is bf16).
    x_bf = x.astype(jnp.bfloat16)
    out_bf = positionwise_feed_forward(x_bf, *params)
    out_bf = jax.block_until_ready(out_bf)
    ref_bf = _reference(x_bf, *params)
    assert out_bf.dtype == jnp.bfloat16
    assert jnp.allclose(out_bf.astype(jnp.float32), ref_bf,
                        atol=1e-1, rtol=1e-1), "bf16-I/O mismatch"

    # 3) d_ff-tiled accumulation path (forced) on a ragged row count, f32 MXU.
    x2 = x[:, :100]                          # N = 200, padded to 208
    out2 = positionwise_feed_forward(x2, *params, tile_rows=128,
                                     mxu_dtype=jnp.float32, ff_tile=256)
    out2 = jax.block_until_ready(out2)
    ref2 = _reference(x2, *params)
    assert out2.shape == x2.shape
    assert jnp.allclose(out2, ref2, atol=2e-2, rtol=2e-2), "ff-tiled mismatch"

    print("KERNEL_OK")
</pallas_src>

<mosaic_0001>
module attributes {stable_mosaic.version = 11 : i64} {
  func.func @_ffn_kernel_resident(%arg0: i32, %arg1: memref<256x128xf32, #tpu.memory_space<vmem>>, %arg2: memref<1x128xf32, #tpu.memory_space<vmem>>, %arg3: memref<1x128xf32, #tpu.memory_space<vmem>>, %arg4: memref<128x512xbf16, #tpu.memory_space<vmem>>, %arg5: memref<1x512xf32, #tpu.memory_space<vmem>>, %arg6: memref<512x128xbf16, #tpu.memory_space<vmem>>, %arg7: memref<1x128xf32, #tpu.memory_space<vmem>>, %arg8: memref<256x128xf32, #tpu.memory_space<vmem>>) attributes {dimension_semantics = [#tpu.dimension_semantics<parallel>], iteration_bounds = array<i64: 2>, scalar_prefetch = 0 : i64, scratch_operands = 0 : i64, tpu.core_type = #tpu.core_type<tc>, window_params = [{transform_indices = @transform_0, window_bounds = array<i64: 256, 128>}, {pipeline_mode = #tpu.pipeline_mode<synchronous>, transform_indices = @transform_1, window_bounds = array<i64: 1, 128>}, {pipeline_mode = #tpu.pipeline_mode<synchronous>, transform_indices = @transform_2, window_bounds = array<i64: 1, 128>}, {pipeline_mode = #tpu.pipeline_mode<synchronous>, transform_indices = @transform_3, window_bounds = array<i64: 128, 512>}, {pipeline_mode = #tpu.pipeline_mode<synchronous>, transform_indices = @transform_4, window_bounds = array<i64: 1, 512>}, {pipeline_mode = #tpu.pipeline_mode<synchronous>, transform_indices = @transform_5, window_bounds = array<i64: 512, 128>}, {pipeline_mode = #tpu.pipeline_mode<synchronous>, transform_indices = @transform_6, window_bounds = array<i64: 1, 128>}, {transform_indices = @transform_7, window_bounds = array<i64: 256, 128>}]} {
    %c0 = arith.constant 0 : index
    %c0_0 = arith.constant 0 : index
    %0 = vector.load %arg1[%c0, %c0_0] : memref<256x128xf32, #tpu.memory_space<vmem>>, vector<256x128xf32>
    %cst = arith.constant dense<0.000000e+00> : vector<256xf32>
    %1 = vector.multi_reduction <add>, %0, %cst [1] : vector<256x128xf32> to vector<256xf32>
    %2 = vector.shape_cast %1 : vector<256xf32> to vector<256x1xf32>
    %cst_1 = arith.constant 1.280000e+02 : f32
    %3 = vector.broadcast %cst_1 : f32 to vector<256x1xf32>
    %4 = arith.divf %2, %3 : vector<256x1xf32>
    %5 = arith.mulf %0, %0 : vector<256x128xf32>
    %cst_2 = arith.constant dense<0.000000e+00> : vector<256xf32>
    %6 = vector.multi_reduction <add>, %5, %cst_2 [1] : vector<256x128xf32> to vector<256xf32>
    %7 = vector.shape_cast %6 : vector<256xf32> to vector<256x1xf32>
    %cst_3 = arith.constant 1.280000e+02 : f32
    %8 = vector.broadcast %cst_3 : f32 to vector<256x1xf32>
    %9 = arith.divf %7, %8 : vector<256x1xf32>
    %10 = arith.mulf %4, %4 : vector<256x1xf32>
    %11 = arith.subf %9, %10 : vector<256x1xf32>
    %cst_4 = arith.constant 0.000000e+00 : f32
    %12 = vector.broadcast %cst_4 : f32 to vector<256x1xf32>
    %13 = arith.maximumf %11, %12 : vector<256x1xf32>
    %14 = vector.broadcast %4 : vector<256x1xf32> to vector<256x128xf32>
    %15 = arith.subf %0, %14 : vector<256x128xf32>
    %cst_5 = arith.constant 9.99999997E-7 : f32
    %16 = vector.broadcast %cst_5 : f32 to vector<256x1xf32>
    %17 = arith.addf %13, %16 : vector<256x1xf32>
    %18 = math.rsqrt %17 : vector<256x1xf32>
    %19 = vector.broadcast %18 : vector<256x1xf32> to vector<256x128xf32>
    %20 = arith.mulf %15, %19 : vector<256x128xf32>
    %c0_6 = arith.constant 0 : index
    %c0_7 = arith.constant 0 : index
    %21 = vector.load %arg2[%c0_6, %c0_7] : memref<1x128xf32, #tpu.memory_space<vmem>>, vector<1x128xf32>
    %22 = vector.broadcast %21 : vector<1x128xf32> to vector<256x128xf32>
    %23 = arith.mulf %20, %22 : vector<256x128xf32>
    %c0_8 = arith.constant 0 : index
    %c0_9 = arith.constant 0 : index
    %24 = vector.load %arg3[%c0_8, %c0_9] : memref<1x128xf32, #tpu.memory_space<vmem>>, vector<1x128xf32>
    %25 = vector.broadcast %24 : vector<1x128xf32> to vector<256x128xf32>
    %26 = arith.addf %23, %25 : vector<256x128xf32>
    %27 = arith.truncf %26 : vector<256x128xf32> to vector<256x128xbf16>
    %c0_10 = arith.constant 0 : index
    %c0_11 = arith.constant 0 : index
    %28 = vector.load %arg4[%c0_10, %c0_11] : memref<128x512xbf16, #tpu.memory_space<vmem>>, vector<128x512xbf16>
    %cst_12 = arith.constant dense<0.000000e+00> : vector<256x512xf32>
    %29 = tpu.matmul %27, %28, %cst_12 {dimension_numbers = #tpu.dot_dimension_numbers<[1], [0], [0], [1], [0, 0, 1, 1], [], []>} : vector<256x128xbf16>, vector<128x512xbf16>, vector<256x512xf32> -> vector<256x512xf32>
    %c0_13 = arith.constant 0 : index
    %c0_14 = arith.constant 0 : index
    %30 = vector.load %arg5[%c0_13, %c0_14] : memref<1x512xf32, #tpu.memory_space<vmem>>, vector<1x512xf32>
    %31 = vector.broadcast %30 : vector<1x512xf32> to vector<256x512xf32>
    %32 = arith.addf %29, %31 : vector<256x512xf32>
    %cst_15 = arith.constant 0.000000e+00 : f32
    %33 = vector.broadcast %cst_15 : f32 to vector<256x512xf32>
    %34 = arith.maximumf %32, %33 : vector<256x512xf32>
    %35 = arith.truncf %34 : vector<256x512xf32> to vector<256x512xbf16>
    %c0_16 = arith.constant 0 : index
    %c0_17 = arith.constant 0 : index
    %36 = vector.load %arg6[%c0_16, %c0_17] : memref<512x128xbf16, #tpu.memory_space<vmem>>, vector<512x128xbf16>
    %cst_18 = arith.constant dense<0.000000e+00> : vector<256x128xf32>
    %37 = tpu.matmul %35, %36, %cst_18 {dimension_numbers = #tpu.dot_dimension_numbers<[1], [0], [0], [1], [0, 0, 1, 1], [], []>} : vector<256x512xbf16>, vector<512x128xbf16>, vector<256x128xf32> -> vector<256x128xf32>
    %c0_19 = arith.constant 0 : index
    %c0_20 = arith.constant 0 : index
    %38 = vector.load %arg7[%c0_19, %c0_20] : memref<1x128xf32, #tpu.memory_space<vmem>>, vector<1x128xf32>
    %39 = vector.broadcast %38 : vector<1x128xf32> to vector<256x128xf32>
    %40 = arith.addf %37, %39 : vector<256x128xf32>
    %c0_21 = arith.constant 0 : index
    %c0_22 = arith.constant 0 : index
    %41 = vector.load %arg1[%c0_21, %c0_22] : memref<256x128xf32, #tpu.memory_space<vmem>>, vector<256x128xf32>
    %42 = arith.addf %40, %41 : vector<256x128xf32>
    %c0_23 = arith.constant 0 : index
    %c0_24 = arith.constant 0 : index
    %43 = vector.load %arg8[%c0_23, %c0_24] : memref<256x128xf32, #tpu.memory_space<vmem>>, vector<256x128xf32>
    tpu.vector_store %arg8[%c0_23, %c0_24], %42 {strides = array<i32>} : memref<256x128xf32, #tpu.memory_space<vmem>>, vector<256x128xf32>,
    return
  }
  func.func @transform_0(%arg0: i32) -> (i32, i32) {
    %c0_i32 = arith.constant 0 : i32
    %c0_i32_0 = arith.constant 0 : i32
    return %arg0, %c0_i32 : i32, i32
  }
  func.func @transform_1(%arg0: i32) -> (i32, i32) {
    %c0_i32 = arith.constant 0 : i32
    %c0_i32_0 = arith.constant 0 : i32
    %c0_i32_1 = arith.constant 0 : i32
    return %c0_i32, %c0_i32_0 : i32, i32
  }
  func.func @transform_2(%arg0: i32) -> (i32, i32) {
    %c0_i32 = arith.constant 0 : i32
    %c0_i32_0 = arith.constant 0 : i32
    %c0_i32_1 = arith.constant 0 : i32
    return %c0_i32, %c0_i32_0 : i32, i32
  }
  func.func @transform_3(%arg0: i32) -> (i32, i32) {
    %c0_i32 = arith.constant 0 : i32
    %c0_i32_0 = arith.constant 0 : i32
    %c0_i32_1 = arith.constant 0 : i32
    return %c0_i32, %c0_i32_0 : i32, i32
  }
  func.func @transform_4(%arg0: i32) -> (i32, i32) {
    %c0_i32 = arith.constant 0 : i32
    %c0_i32_0 = arith.constant 0 : i32
    %c0_i32_1 = arith.constant 0 : i32
    return %c0_i32, %c0_i32_0 : i32, i32
  }
  func.func @transform_5(%arg0: i32) -> (i32, i32) {
    %c0_i32 = arith.constant 0 : i32
    %c0_i32_0 = arith.constant 0 : i32
    %c0_i32_1 = arith.constant 0 : i32
    return %c0_i32, %c0_i32_0 : i32, i32
  }
  func.func @transform_6(%arg0: i32) -> (i32, i32) {
    %c0_i32 = arith.constant 0 : i32
    %c0_i32_0 = arith.constant 0 : i32
    %c0_i32_1 = arith.constant 0 : i32
    return %c0_i32, %c0_i32_0 : i32, i32
  }
  func.func @transform_7(%arg0: i32) -> (i32, i32) {
    %c0_i32 = arith.constant 0 : i32
    %c0_i32_0 = arith.constant 0 : i32
    return %arg0, %c0_i32 : i32, i32
  }
}

</mosaic_0001>

<llo_original>
// kernel: tpu_custom_call.1
$region0: #{tpu_custom_call.1}
  #allocation0 [shape = 'u32[]', space=smem, size = 0x4, offset = 0x4, fixed_abs, tag = 'smem constant byte address 0x4 - core index']
  #allocation1 [shape = 'u32[144,128]{1,0:T(1,128)}', space=vmem, size = 0x12000, scoped, tag = 'internal scratch']
  %s0 = inlined_call_operand.hbm [shape: f32[512,128], index: 0, kind: input, shape index: {}]
  %s1 = inlined_call_operand.vmem [shape: f32[1,128], index: 1, kind: input, shape index: {}]
  %s2 = inlined_call_operand.vmem [shape: f32[1,128], index: 2, kind: input, shape index: {}]
  %s3 = inlined_call_operand.hbm [shape: bf16[128,512], index: 3, kind: input, shape index: {}]
  %s4 = inlined_call_operand.vmem [shape: f32[1,512], index: 4, kind: input, shape index: {}]
  %s5 = inlined_call_operand.hbm [shape: bf16[512,128], index: 5, kind: input, shape index: {}]
  %s6 = inlined_call_operand.vmem [shape: f32[1,128], index: 6, kind: input, shape index: {}]
  %s7 = inlined_call_operand.hbm [shape: f32[512,128], index: 7, kind: output, shape index: {}]
  %s8 = sld [smem:[#allocation0]]
  $region73: #{tpu_custom_call.1} parent=0
    _
  %s10 = ssub.s32 1, %s8
  %s11 = scalar_select 0, %s10, %s8
  $region1: #{tpu_custom_call.1} parent=0
    #allocation2 [shape = 'u8[262144]{0}', space=vmem, size = 0x40000, scoped, tag = 'input window, operand 0']
    #allocation3 [shape = 's32[2]{0}', space=sflag, size = 0x8, scoped, tag = 'scoped memory for tpu_custom_call.1']
    #allocation4 [shape = 's32[2]{0}', space=sflag, size = 0x8, scoped, tag = 'scoped memory for tpu_custom_call.1']
    #allocation5 [shape = 'u8[131072]{0}', space=vmem, size = 0x20000, scoped, tag = 'input window, operand 3, single buffered']
    #allocation6 [shape = 's32[1]{0}', space=sflag, size = 0x4, scoped, tag = 'scoped memory for tpu_custom_call.1']
    #allocation7 [shape = 'u8[131072]{0}', space=vmem, size = 0x20000, scoped, tag = 'input window, operand 5, single buffered']
    #allocation8 [shape = 'u8[262144]{0}', space=vmem, size = 0x40000, scoped, tag = 'output window, operand 0']
    %12 = vsyncpa [#allocation3], 0
    %s13 = scalar_lea.sflag [#allocation3], 1
    %14 = vsyncpa %s13, 0
    %15 = vsyncpa [#allocation6], 0
    %16 = vsyncpa [#allocation4], 0
    %s17 = scalar_lea.sflag [#allocation4], 1
    %18 = vsyncpa %s17, 0
    loop: start=0, step=1, limit=4
    $region2: #{tpu_custom_call.1} parent=1 // loop_pre_header
      _
    $region3: #{tpu_custom_call.1} parent=1 // loop_header
      %s20 = sphi 0, %s24
      %p21 = scmp.ge.s32.totalorder %s20, 4
      %s30 = sphi 0, %s32
      %s33 = sphi 0, %s30
      %s34 = sphi 0, %s33
      %s50 = sphi 0, %s34
      %s54 = sphi 0, %s54
      %s56 = sphi 0, %s54
      %s57 = sphi 0, %s56
      %s71 = sphi 0, %s57
      %s75 = sphi 0, %s75
      %s77 = sphi 0, %s75
      %s78 = sphi 0, %s77
      %s92 = sphi 0, %s78
      %s96 = sphi 0, %s96
      %s98 = sphi 0, %s96
      %s99 = sphi 0, %s98
      %s113 = sphi 0, %s99
      %s117 = sphi 0, %s117
      %s119 = sphi 0, %s117
      %s120 = sphi 0, %s119
      %s134 = sphi 0, %s120
      %s138 = sphi 0, %s138
      %s140 = sphi 0, %s138
      %s141 = sphi 0, %s140
      %s155 = sphi 0, %s141
      %s159 = sphi 0, %s159
      %s161 = sphi 0, %s159
      %s162 = sphi 0, %s161
      %s176 = sphi 0, %s162
      %s182 = sphi 0, %s184
      %s185 = sphi 0, %s182
      %s186 = sphi 0, %s185
      %s202 = sphi 0, %s186
    $region4: #{tpu_custom_call.1} parent=1 // loop_header_branch
      %23 = sbr.rel (%p21) target = $region8
    $region5: #{tpu_custom_call.1} parent=1 // loop_body
      %s25 = ssub.s32 %s20, 1
      %s26 = ssub.s32 %s20, 2
      %s27 = sadd.s32 %s20, 1
      %s28 = ssub.s32 %s20, %s27
      %p29 = scmp.eq.s32.totalorder %s28, 0
      %s31 = sadd.s32 %s30, 1
      %s32 = scalar_select %p29, %s30, %s31
      %p35 = pneg %p29
      %p36 = scmp.eq.s32.totalorder %s20, 1
      %p37 = por %p35, %p36
      %p38 = scmp.ne.s32.totalorder %s30, %s33
      %p39 = scmp.eq.s32.totalorder %s20, 0
      %p40 = por %p38, %p39
      %p41 = scmp.ne.s32.totalorder %s30, %s33
      %p42 = scmp.eq.s32.totalorder %s25, 1
      %p43 = por %p41, %p42
      %p44 = scmp.ne.s32.totalorder %s33, %s34
      %p45 = scmp.eq.s32.totalorder %s25, 0
      %p46 = por %p44, %p45
      %p47 = scmp.ne.s32.totalorder %s33, %s34
      %p48 = scmp.eq.s32.totalorder %s26, 1
      %p49 = por %p47, %p48
      %p51 = scmp.ne.s32.totalorder %s34, %s50
      %p52 = scmp.eq.s32.totalorder %s26, 0
      %p53 = por %p51, %p52
      %s55 = sadd.s32 %s54, 1
      %p58 = scmp.eq.s32.totalorder %s20, 1
      %p59 = scmp.ne.s32.totalorder %s54, %s56
      %p60 = scmp.eq.s32.totalorder %s20, 0
      %p61 = por %p59, %p60
      %p62 = scmp.ne.s32.totalorder %s54, %s56
      %p63 = scmp.eq.s32.totalorder %s25, 1
      %p64 = por %p62, %p63
      %p65 = scmp.ne.s32.totalorder %s56, %s57
      %p66 = scmp.eq.s32.totalorder %s25, 0
      %p67 = por %p65, %p66
      %p68 = scmp.ne.s32.totalorder %s56, %s57
      %p69 = scmp.eq.s32.totalorder %s26, 1
      %p70 = por %p68, %p69
      %p72 = scmp.ne.s32.totalorder %s57, %s71
      %p73 = scmp.eq.s32.totalorder %s26, 0
      %p74 = por %p72, %p73
      %s76 = sadd.s32 %s75, 1
      %p79 = scmp.eq.s32.totalorder %s20, 1
      %p80 = scmp.ne.s32.totalorder %s75, %s77
      %p81 = scmp.eq.s32.totalorder %s20, 0
      %p82 = por %p80, %p81
      %p83 = scmp.ne.s32.totalorder %s75, %s77
      %p84 = scmp.eq.s32.totalorder %s25, 1
      %p85 = por %p83, %p84
      %p86 = scmp.ne.s32.totalorder %s77, %s78
      %p87 = scmp.eq.s32.totalorder %s25, 0
      %p88 = por %p86, %p87
      %p89 = scmp.ne.s32.totalorder %s77, %s78
      %p90 = scmp.eq.s32.totalorder %s26, 1
      %p91 = por %p89, %p90
      %p93 = scmp.ne.s32.totalorder %s78, %s92
      %p94 = scmp.eq.s32.totalorder %s26, 0
      %p95 = por %p93, %p94
      %s97 = sadd.s32 %s96, 1
      %p100 = scmp.eq.s32.totalorder %s20, 1
      %p101 = scmp.ne.s32.totalorder %s96, %s98
      %p102 = scmp.eq.s32.totalorder %s20, 0
      %p103 = por %p101, %p102
      %p104 = scmp.ne.s32.totalorder %s96, %s98
      %p105 = scmp.eq.s32.totalorder %s25, 1
      %p106 = por %p104, %p105
      %p107 = scmp.ne.s32.totalorder %s98, %s99
      %p108 = scmp.eq.s32.totalorder %s25, 0
      %p109 = por %p107, %p108
      %p110 = scmp.ne.s32.totalorder %s98, %s99
      %p111 = scmp.eq.s32.totalorder %s26, 1
      %p112 = por %p110, %p111
      %p114 = scmp.ne.s32.totalorder %s99, %s113
      %p115 = scmp.eq.s32.totalorder %s26, 0
      %p116 = por %p114, %p115
      %s118 = sadd.s32 %s117, 1
      %p121 = scmp.eq.s32.totalorder %s20, 1
      %p122 = scmp.ne.s32.totalorder %s117, %s119
      %p123 = scmp.eq.s32.totalorder %s20, 0
      %p124 = por %p122, %p123
      %p125 = scmp.ne.s32.totalorder %s117, %s119
      %p126 = scmp.eq.s32.totalorder %s25, 1
      %p127 = por %p125, %p126
      %p128 = scmp.ne.s32.totalorder %s119, %s120
      %p129 = scmp.eq.s32.totalorder %s25, 0
      %p130 = por %p128, %p129
      %p131 = scmp.ne.s32.totalorder %s119, %s120
      %p132 = scmp.eq.s32.totalorder %s26, 1
      %p133 = por %p131, %p132
      %p135 = scmp.ne.s32.totalorder %s120, %s134
      %p136 = scmp.eq.s32.totalorder %s26, 0
      %p137 = por %p135, %p136
      %s139 = sadd.s32 %s138, 1
      %p142 = scmp.eq.s32.totalorder %s20, 1
      %p143 = scmp.ne.s32.totalorder %s138, %s140
      %p144 = scmp.eq.s32.totalorder %s20, 0
      %p145 = por %p143, %p144
      %p146 = scmp.ne.s32.totalorder %s138, %s140
      %p147 = scmp.eq.s32.totalorder %s25, 1
      %p148 = por %p146, %p147
      %p149 = scmp.ne.s32.totalorder %s140, %s141
      %p150 = scmp.eq.s32.totalorder %s25, 0
      %p151 = por %p149, %p150
      %p152 = scmp.ne.s32.totalorder %s140, %s141
      %p153 = scmp.eq.s32.totalorder %s26, 1
      %p154 = por %p152, %p153
      %p156 = scmp.ne.s32.totalorder %s141, %s155
      %p157 = scmp.eq.s32.totalorder %s26, 0
      %p158 = por %p156, %p157
      %s160 = sadd.s32 %s159, 1
      %p163 = scmp.eq.s32.totalorder %s20, 1
      %p164 = scmp.ne.s32.totalorder %s159, %s161
      %p165 = scmp.eq.s32.totalorder %s20, 0
      %p166 = por %p164, %p165
      %p167 = scmp.ne.s32.totalorder %s159, %s161
      %p168 = scmp.eq.s32.totalorder %s25, 1
      %p169 = por %p167, %p168
      %p170 = scmp.ne.s32.totalorder %s161, %s162
      %p171 = scmp.eq.s32.totalorder %s25, 0
      %p172 = por %p170, %p171
      %p173 = scmp.ne.s32.totalorder %s161, %s162
      %p174 = scmp.eq.s32.totalorder %s26, 1
      %p175 = por %p173, %p174
      %p177 = scmp.ne.s32.totalorder %s162, %s176
      %p178 = scmp.eq.s32.totalorder %s26, 0
      %p179 = por %p177, %p178
      %s180 = ssub.s32 %s20, %s27
      %p181 = scmp.eq.s32.totalorder %s180, 0
      %s183 = sadd.s32 %s182, 1
      %s184 = scalar_select %p181, %s182, %s183
      %p187 = pneg %p181
      %p188 = scmp.eq.s32.totalorder %s20, 1
      %p189 = por %p187, %p188
      %p190 = scmp.ne.s32.totalorder %s182, %s185
      %p191 = scmp.eq.s32.totalorder %s20, 0
      %p192 = por %p190, %p191
      %p193 = scmp.ne.s32.totalorder %s182, %s185
      %p194 = scmp.eq.s32.totalorder %s25, 1
      %p195 = por %p193, %p194
      %p196 = scmp.ne.s32.totalorder %s185, %s186
      %p197 = scmp.eq.s32.totalorder %s25, 0
      %p198 = por %p196, %p197
      %p199 = scmp.ne.s32.totalorder %s185, %s186
      %p200 = scmp.eq.s32.totalorder %s26, 1
      %p201 = por %p199, %p200
      %p203 = scmp.ne.s32.totalorder %s186, %s202
      %p204 = scmp.eq.s32.totalorder %s26, 0
      %p205 = por %p203, %p204
      %p206 = scmp.le.s32.totalorder 1, %s20
      %p207 = scmp.lt.s32.totalorder %s20, 3
      %p208 = pnand %p206, %p207
      %p209 = pneg %p208
      // Predicated region
      $region9: #{tpu_custom_call.1} parent=5 // pred_check
        _
      $region10: #{tpu_custom_call.1} parent=5 // pred_check_branch
        %211 = sbr.rel (%p208) target = $region12
      $region11: #{tpu_custom_call.1} parent=5 // pred_region
        %s212 = ssub.s32 %s20, 1
        // Predicated region
        $region13: #{tpu_custom_call.1} parent=11 // pred_check
          %p213 = pneg %p67
        $region14: #{tpu_custom_call.1} parent=11 // pred_check_branch
          %215 = sbr.rel (%p213) target = $region16
        $region15: #{tpu_custom_call.1} parent=11 // pred_region
          _
        $region16: #{tpu_custom_call.1} parent=11 // pred_fallthru
          _
        // Predicated region
        $region17: #{tpu_custom_call.1} parent=11 // pred_check
          %p216 = pneg %p88
        $region18: #{tpu_custom_call.1} parent=11 // pred_check_branch
          %218 = sbr.rel (%p216) target = $region20
        $region19: #{tpu_custom_call.1} parent=11 // pred_region
          _
        $region20: #{tpu_custom_call.1} parent=11 // pred_fallthru
          _
        // Predicated region
        $region21: #{tpu_custom_call.1} parent=11 // pred_check
          %p219 = pneg %p109
        $region22: #{tpu_custom_call.1} parent=11 // pred_check_branch
          %221 = sbr.rel (%p219) target = $region24
        $region23: #{tpu_custom_call.1} parent=11 // pred_region
          %s223 = ssub.s32 4096, 4096
          %224 = vsyncadd [#allocation6], %s223
          %s225 = sshll.u32 [#allocation5], 4
          %s226 = int_to_ptr.vmem [resolvable:$true] %s225
          %231 = dma.hbm_to_vmem [thread:$0]  %s3, 4096, %s226, [#allocation6], 256, 256, 16
        $region24: #{tpu_custom_call.1} parent=11 // pred_fallthru
          _
        // Predicated region
        $region25: #{tpu_custom_call.1} parent=11 // pred_check
          %p232 = pneg %p130
        $region26: #{tpu_custom_call.1} parent=11 // pred_check_branch
          %234 = sbr.rel (%p232) target = $region28
        $region27: #{tpu_custom_call.1} parent=11 // pred_region
          _
        $region28: #{tpu_custom_call.1} parent=11 // pred_fallthru
          _
        // Predicated region
        $region29: #{tpu_custom_call.1} parent=11 // pred_check
          %p235 = pneg %p151
        $region30: #{tpu_custom_call.1} parent=11 // pred_check_branch
          %237 = sbr.rel (%p235) target = $region32
        $region31: #{tpu_custom_call.1} parent=11 // pred_region
          %s239 = ssub.s32 4096, 4096
          %240 = vsyncadd [#allocation6], %s239
          %s241 = sshll.u32 [#allocation7], 4
          %s242 = int_to_ptr.vmem [resolvable:$true] %s241
          %247 = dma.hbm_to_vmem [thread:$0]  %s5, 4096, %s242, [#allocation6], 64, 64, 4
        $region32: #{tpu_custom_call.1} parent=11 // pred_fallthru
          _
        // Predicated region
        $region33: #{tpu_custom_call.1} parent=11 // pred_check
          %p248 = pneg %p172
        $region34: #{tpu_custom_call.1} parent=11 // pred_check_branch
          %250 = sbr.rel (%p248) target = $region36
        $region35: #{tpu_custom_call.1} parent=11 // pred_region
          _
        $region36: #{tpu_custom_call.1} parent=11 // pred_fallthru
          _
      $region12: #{tpu_custom_call.1} parent=5 // pred_fallthru
        _
      %p251 = scmp.lt.s32.totalorder %s20, 2
      // Predicated region
      $region37: #{tpu_custom_call.1} parent=5 // pred_check
        %p252 = pneg %p251
      $region38: #{tpu_custom_call.1} parent=5 // pred_check_branch
        %254 = sbr.rel (%p252) target = $region40
      $region39: #{tpu_custom_call.1} parent=5 // pred_region
        // Predicated region
        $region41: #{tpu_custom_call.1} parent=39 // pred_check
          %p255 = pneg %p40
        $region42: #{tpu_custom_call.1} parent=39 // pred_check_branch
          %257 = sbr.rel (%p255) target = $region44
        $region43: #{tpu_custom_call.1} parent=39 // pred_region
          %s258 = sand.u32 %s30, 1
          %s259 = scalar_lea.sflag [#allocation3], %s258
          %s260 = sand.u32 %s30, 1
          %s261 = smul.addr %s260, 256
          %s262 = scalar_lea.vmem [#allocation2], %s261
          %s263 = smul.u32 32, %s20
          %s265 = ssub.s32 4096, 4096
          %266 = vsyncadd %s259, %s265
          %s267 = smul.addr %s263, 128
          %s268 = scalar_lea.hbm %s0, %s267
          %s269 = sshll.u32 %s262, 4
          %s270 = int_to_ptr.vmem [resolvable:$true] %s269
          %275 = dma.hbm_to_vmem [thread:$0]  %s268, 4096, %s270, %s259, 128, 128, 8
        $region44: #{tpu_custom_call.1} parent=39 // pred_fallthru
          _
      $region40: #{tpu_custom_call.1} parent=5 // pred_fallthru
        _
      %p276 = scmp.le.s32.totalorder 1, %s20
      %p277 = scmp.lt.s32.totalorder %s20, 3
      %p278 = pnand %p276, %p277
      %p279 = pneg %p278
      // Predicated region
      $region45: #{tpu_custom_call.1} parent=5 // pred_check
        _
      $region46: #{tpu_custom_call.1} parent=5 // pred_check_branch
        %281 = sbr.rel (%p278) target = $region48
      $region47: #{tpu_custom_call.1} parent=5 // pred_region
        %s282 = ssub.s32 %s20, 1
        %s283 = sand.u32 %s33, 1
        %s284 = scalar_lea.sflag [#allocation3], %s283
        %s285 = sand.u32 %s33, 1
        %s286 = smul.addr %s285, 256
        %s287 = scalar_lea.vmem [#allocation2], %s286
        // Predicated region
        $region49: #{tpu_custom_call.1} parent=47 // pred_check
          %p288 = pneg %p46
        $region50: #{tpu_custom_call.1} parent=47 // pred_check_branch
          %290 = sbr.rel (%p288) target = $region52
        $region51: #{tpu_custom_call.1} parent=47 // pred_region
          %291 = dma.done %s284, 4096
        $region52: #{tpu_custom_call.1} parent=47 // pred_fallthru
          _
        // Predicated region
        $region53: #{tpu_custom_call.1} parent=47 // pred_check
          %p292 = pneg %p109
        $region54: #{tpu_custom_call.1} parent=47 // pred_check_branch
          %294 = sbr.rel (%p292) target = $region56
        $region55: #{tpu_custom_call.1} parent=47 // pred_region
          %295 = dma.done [#allocation6], 4096
        $region56: #{tpu_custom_call.1} parent=47 // pred_fallthru
          _
        // Predicated region
        $region57: #{tpu_custom_call.1} parent=47 // pred_check
          %p296 = pneg %p151
        $region58: #{tpu_custom_call.1} parent=47 // pred_check_branch
          %298 = sbr.rel (%p296) target = $region60
        $region59: #{tpu_custom_call.1} parent=47 // pred_region
          %299 = dma.done [#allocation6], 4096
        $region60: #{tpu_custom_call.1} parent=47 // pred_fallthru
          _
        %s300 = sand.u32 %s33, 1
        %s301 = scalar_lea.sflag [#allocation3], %s300
        %s302 = sand.u32 %s33, 1
        %s303 = smul.addr %s302, 256
        %s304 = scalar_lea.vmem [#allocation2], %s303
        %p305 = pneg %p46
        %p306 = pneg %p43
        %p307 = pneg %p67
        %p308 = pneg %p64
        %p309 = pneg %p88
        %p310 = pneg %p85
        %p311 = pneg %p109
        %p312 = pneg %p106
        %p313 = pneg %p130
        %p314 = pneg %p127
        %p315 = pneg %p151
        %p316 = pneg %p148
        %p317 = pneg %p172
        %p318 = pneg %p169
        %p319 = pneg %p198
        %p320 = pneg %p195
        %s321 = sand.u32 %s185, 1
        %s322 = scalar_lea.sflag [#allocation4], %s321
        %s323 = sand.u32 %s185, 1
        %s324 = smul.addr %s323, 256
        %s325 = scalar_lea.vmem [#allocation8], %s324
        %s326 = smul.u32 32, %s25
        %s327 = smul.u32 32, %s25
        %v329 = vld [vmem:[%s287] sm:$0xff]
        %v330 = vld [vmem:[%s287 + $0x8] sm:$0xff]
        %v331 = vld [vmem:[%s287 + $0x10] sm:$0xff]
        %v332 = vld [vmem:[%s287 + $0x18] sm:$0xff]
        %v333 = vld [vmem:[%s287 + $0x20] sm:$0xff]
        %v334 = vld [vmem:[%s287 + $0x28] sm:$0xff]
        %v335 = vld [vmem:[%s287 + $0x30] sm:$0xff]
        %v336 = vld [vmem:[%s287 + $0x38] sm:$0xff]
        %v337 = vld [vmem:[%s287 + $0x40] sm:$0xff]
        %v338 = vld [vmem:[%s287 + $0x48] sm:$0xff]
        %v339 = vld [vmem:[%s287 + $0x50] sm:$0xff]
        %v340 = vld [vmem:[%s287 + $0x58] sm:$0xff]
        %v341 = vld [vmem:[%s287 + $0x60] sm:$0xff]
        %v342 = vld [vmem:[%s287 + $0x68] sm:$0xff]
        %v343 = vld [vmem:[%s287 + $0x70] sm:$0xff]
        %v344 = vld [vmem:[%s287 + $0x78] sm:$0xff]
        %v345 = vld [vmem:[%s287 + $0x80] sm:$0xff]
        %v346 = vld [vmem:[%s287 + $0x88] sm:$0xff]
        %v347 = vld [vmem:[%s287 + $0x90] sm:$0xff]
        %v348 = vld [vmem:[%s287 + $0x98] sm:$0xff]
        %v349 = vld [vmem:[%s287 + $0xa0] sm:$0xff]
        %v350 = vld [vmem:[%s287 + $0xa8] sm:$0xff]
        %v351 = vld [vmem:[%s287 + $0xb0] sm:$0xff]
        %v352 = vld [vmem:[%s287 + $0xb8] sm:$0xff]
        %v353 = vld [vmem:[%s287 + $0xc0] sm:$0xff]
        %v354 = vld [vmem:[%s287 + $0xc8] sm:$0xff]
        %v355 = vld [vmem:[%s287 + $0xd0] sm:$0xff]
        %v356 = vld [vmem:[%s287 + $0xd8] sm:$0xff]
        %v357 = vld [vmem:[%s287 + $0xe0] sm:$0xff]
        %v358 = vld [vmem:[%s287 + $0xe8] sm:$0xff]
        %v359 = vld [vmem:[%s287 + $0xf0] sm:$0xff]
        %v360 = vld [vmem:[%s287 + $0xf8] sm:$0xff]
        %361 = vadd.xlane.f32.xlu0 %v329
        %v362 = vpop.xlane.xlu0 %361
        %363 = vadd.xlane.f32.xlu0 %v330
        %v364 = vpop.xlane.xlu0 %363
        %365 = vadd.xlane.f32.xlu0 %v331
        %v366 = vpop.xlane.xlu0 %365
        %367 = vadd.xlane.f32.xlu0 %v332
        %v368 = vpop.xlane.xlu0 %367
        %369 = vadd.xlane.f32.xlu0 %v333
        %v370 = vpop.xlane.xlu0 %369
        %371 = vadd.xlane.f32.xlu0 %v334
        %v372 = vpop.xlane.xlu0 %371
        %373 = vadd.xlane.f32.xlu0 %v335
        %v374 = vpop.xlane.xlu0 %373
        %375 = vadd.xlane.f32.xlu0 %v336
        %v376 = vpop.xlane.xlu0 %375
        %377 = vadd.xlane.f32.xlu0 %v337
        %v378 = vpop.xlane.xlu0 %377
        %379 = vadd.xlane.f32.xlu0 %v338
        %v380 = vpop.xlane.xlu0 %379
        %381 = vadd.xlane.f32.xlu0 %v339
        %v382 = vpop.xlane.xlu0 %381
        %383 = vadd.xlane.f32.xlu0 %v340
        %v384 = vpop.xlane.xlu0 %383
        %385 = vadd.xlane.f32.xlu0 %v341
        %v386 = vpop.xlane.xlu0 %385
        %387 = vadd.xlane.f32.xlu0 %v342
        %v388 = vpop.xlane.xlu0 %387
        %389 = vadd.xlane.f32.xlu0 %v343
        %v390 = vpop.xlane.xlu0 %389
        %391 = vadd.xlane.f32.xlu0 %v344
        %v392 = vpop.xlane.xlu0 %391
        %393 = vadd.xlane.f32.xlu0 %v345
        %v394 = vpop.xlane.xlu0 %393
        %395 = vadd.xlane.f32.xlu0 %v346
        %v396 = vpop.xlane.xlu0 %395
        %397 = vadd.xlane.f32.xlu0 %v347
        %v398 = vpop.xlane.xlu0 %397
        %399 = vadd.xlane.f32.xlu0 %v348
        %v400 = vpop.xlane.xlu0 %399
        %401 = vadd.xlane.f32.xlu0 %v349
        %v402 = vpop.xlane.xlu0 %401
        %403 = vadd.xlane.f32.xlu0 %v350
        %v404 = vpop.xlane.xlu0 %403
        %405 = vadd.xlane.f32.xlu0 %v351
        %v406 = vpop.xlane.xlu0 %405
        %407 = vadd.xlane.f32.xlu0 %v352
        %v408 = vpop.xlane.xlu0 %407
        %409 = vadd.xlane.f32.xlu0 %v353
        %v410 = vpop.xlane.xlu0 %409
        %411 = vadd.xlane.f32.xlu0 %v354
        %v412 = vpop.xlane.xlu0 %411
        %413 = vadd.xlane.f32.xlu0 %v355
        %v414 = vpop.xlane.xlu0 %413
        %415 = vadd.xlane.f32.xlu0 %v356
        %v416 = vpop.xlane.xlu0 %415
        %417 = vadd.xlane.f32.xlu0 %v357
        %v418 = vpop.xlane.xlu0 %417
        %419 = vadd.xlane.f32.xlu0 %v358
        %v420 = vpop.xlane.xlu0 %419
        %421 = vadd.xlane.f32.xlu0 %v359
        %v422 = vpop.xlane.xlu0 %421
        %423 = vadd.xlane.f32.xlu0 %v360
        %v424 = vpop.xlane.xlu0 %423
        %v425 = vrcp.pop 128.0
        %v426 = vmul.f32 %v362, %v425
        %v427 = vmul.f32 %v364, %v425
        %v428 = vmul.f32 %v366, %v425
        %v429 = vmul.f32 %v368, %v425
        %v430 = vmul.f32 %v370, %v425
        %v431 = vmul.f32 %v372, %v425
        %v432 = vmul.f32 %v374, %v425
        %v433 = vmul.f32 %v376, %v425
        %v434 = vmul.f32 %v378, %v425
        %v435 = vmul.f32 %v380, %v425
        %v436 = vmul.f32 %v382, %v425
        %v437 = vmul.f32 %v384, %v425
        %v438 = vmul.f32 %v386, %v425
        %v439 = vmul.f32 %v388, %v425
        %v440 = vmul.f32 %v390, %v425
        %v441 = vmul.f32 %v392, %v425
        %v442 = vmul.f32 %v394, %v425
        %v443 = vmul.f32 %v396, %v425
        %v444 = vmul.f32 %v398, %v425
        %v445 = vmul.f32 %v400, %v425
        %v446 = vmul.f32 %v402, %v425
        %v447 = vmul.f32 %v404, %v425
        %v448 = vmul.f32 %v406, %v425
        %v449 = vmul.f32 %v408, %v425
        %v450 = vmul.f32 %v410, %v425
        %v451 = vmul.f32 %v412, %v425
        %v452 = vmul.f32 %v414, %v425
        %v453 = vmul.f32 %v416, %v425
        %v454 = vmul.f32 %v418, %v425
        %v455 = vmul.f32 %v420, %v425
        %v456 = vmul.f32 %v422, %v425
        %v457 = vmul.f32 %v424, %v425
        %v458 = vmul.f32 %v329, %v329
        %v459 = vmul.f32 %v330, %v330
        %v460 = vmul.f32 %v331, %v331
        %v461 = vmul.f32 %v332, %v332
        %v462 = vmul.f32 %v333, %v333
        %v463 = vmul.f32 %v334, %v334
        %v464 = vmul.f32 %v335, %v335
        %v465 = vmul.f32 %v336, %v336
        %v466 = vmul.f32 %v337, %v337
        %v467 = vmul.f32 %v338, %v338
        %v468 = vmul.f32 %v339, %v339
        %v469 = vmul.f32 %v340, %v340
        %v470 = vmul.f32 %v341, %v341
        %v471 = vmul.f32 %v342, %v342
        %v472 = vmul.f32 %v343, %v343
        %v473 = vmul.f32 %v344, %v344
        %v474 = vmul.f32 %v345, %v345
        %v475 = vmul.f32 %v346, %v346
        %v476 = vmul.f32 %v347, %v347
        %v477 = vmul.f32 %v348, %v348
        %v478 = vmul.f32 %v349, %v349
        %v479 = vmul.f32 %v350, %v350
        %v480 = vmul.f32 %v351, %v351
        %v481 = vmul.f32 %v352, %v352
        %v482 = vmul.f32 %v353, %v353
        %v483 = vmul.f32 %v354, %v354
        %v484 = vmul.f32 %v355, %v355
        %v485 = vmul.f32 %v356, %v356
        %v486 = vmul.f32 %v357, %v357
        %v487 = vmul.f32 %v358, %v358
        %v488 = vmul.f32 %v359, %v359
        %v489 = vmul.f32 %v360, %v360
        %490 = vadd.xlane.f32.xlu0 %v458
        %v491 = vpop.xlane.xlu0 %490
        %492 = vadd.xlane.f32.xlu0 %v459
        %v493 = vpop.xlane.xlu0 %492
        %494 = vadd.xlane.f32.xlu0 %v460
        %v495 = vpop.xlane.xlu0 %494
        %496 = vadd.xlane.f32.xlu0 %v461
        %v497 = vpop.xlane.xlu0 %496
        %498 = vadd.xlane.f32.xlu0 %v462
        %v499 = vpop.xlane.xlu0 %498
        %500 = vadd.xlane.f32.xlu0 %v463
        %v501 = vpop.xlane.xlu0 %500
        %502 = vadd.xlane.f32.xlu0 %v464
        %v503 = vpop.xlane.xlu0 %502
        %504 = vadd.xlane.f32.xlu0 %v465
        %v505 = vpop.xlane.xlu0 %504
        %506 = vadd.xlane.f32.xlu0 %v466
        %v507 = vpop.xlane.xlu0 %506
        %508 = vadd.xlane.f32.xlu0 %v467
        %v509 = vpop.xlane.xlu0 %508
        %510 = vadd.xlane.f32.xlu0 %v468
        %v511 = vpop.xlane.xlu0 %510
        %512 = vadd.xlane.f32.xlu0 %v469
        %v513 = vpop.xlane.xlu0 %512
        %514 = vadd.xlane.f32.xlu0 %v470
        %v515 = vpop.xlane.xlu0 %514
        %516 = vadd.xlane.f32.xlu0 %v471
        %v517 = vpop.xlane.xlu0 %516
        %518 = vadd.xlane.f32.xlu0 %v472
        %v519 = vpop.xlane.xlu0 %518
        %520 = vadd.xlane.f32.xlu0 %v473
        %v521 = vpop.xlane.xlu0 %520
        %522 = vadd.xlane.f32.xlu0 %v474
        %v523 = vpop.xlane.xlu0 %522
        %524 = vadd.xlane.f32.xlu0 %v475
        %v525 = vpop.xlane.xlu0 %524
        %526 = vadd.xlane.f32.xlu0 %v476
        %v527 = vpop.xlane.xlu0 %526
        %528 = vadd.xlane.f32.xlu0 %v477
        %v529 = vpop.xlane.xlu0 %528
        %530 = vadd.xlane.f32.xlu0 %v478
        %v531 = vpop.xlane.xlu0 %530
        %532 = vadd.xlane.f32.xlu0 %v479
        %v533 = vpop.xlane.xlu0 %532
        %534 = vadd.xlane.f32.xlu0 %v480
        %v535 = vpop.xlane.xlu0 %534
        %536 = vadd.xlane.f32.xlu0 %v481
        %v537 = vpop.xlane.xlu0 %536
        %538 = vadd.xlane.f32.xlu0 %v482
        %v539 = vpop.xlane.xlu0 %538
        %540 = vadd.xlane.f32.xlu0 %v483
        %v541 = vpop.xlane.xlu0 %540
        %542 = vadd.xlane.f32.xlu0 %v484
        %v543 = vpop.xlane.xlu0 %542
        %544 = vadd.xlane.f32.xlu0 %v485
        %v545 = vpop.xlane.xlu0 %544
        %546 = vadd.xlane.f32.xlu0 %v486
        %v547 = vpop.xlane.xlu0 %546
        %548 = vadd.xlane.f32.xlu0 %v487
        %v549 = vpop.xlane.xlu0 %548
        %550 = vadd.xlane.f32.xlu0 %v488
        %v551 = vpop.xlane.xlu0 %550
        %552 = vadd.xlane.f32.xlu0 %v489
        %v553 = vpop.xlane.xlu0 %552
        %v554 = vmul.f32 %v491, %v425
        %v555 = vmul.f32 %v493, %v425
        %v556 = vmul.f32 %v495, %v425
        %v557 = vmul.f32 %v497, %v425
        %v558 = vmul.f32 %v499, %v425
        %v559 = vmul.f32 %v501, %v425
        %v560 = vmul.f32 %v503, %v425
        %v561 = vmul.f32 %v505, %v425
        %v562 = vmul.f32 %v507, %v425
        %v563 = vmul.f32 %v509, %v425
        %v564 = vmul.f32 %v511, %v425
        %v565 = vmul.f32 %v513, %v425
        %v566 = vmul.f32 %v515, %v425
        %v567 = vmul.f32 %v517, %v425
        %v568 = vmul.f32 %v519, %v425
        %v569 = vmul.f32 %v521, %v425
        %v570 = vmul.f32 %v523, %v425
        %v571 = vmul.f32 %v525, %v425
        %v572 = vmul.f32 %v527, %v425
        %v573 = vmul.f32 %v529, %v425
        %v574 = vmul.f32 %v531, %v425
        %v575 = vmul.f32 %v533, %v425
        %v576 = vmul.f32 %v535, %v425
        %v577 = vmul.f32 %v537, %v425
        %v578 = vmul.f32 %v539, %v425
        %v579 = vmul.f32 %v541, %v425
        %v580 = vmul.f32 %v543, %v425
        %v581 = vmul.f32 %v545, %v425
        %v582 = vmul.f32 %v547, %v425
        %v583 = vmul.f32 %v549, %v425
        %v584 = vmul.f32 %v551, %v425
        %v585 = vmul.f32 %v553, %v425
        %v586 = vmul.f32 %v426, %v426
        %v587 = vmul.f32 %v427, %v427
        %v588 = vmul.f32 %v428, %v428
        %v589 = vmul.f32 %v429, %v429
        %v590 = vmul.f32 %v430, %v430
        %v591 = vmul.f32 %v431, %v431
        %v592 = vmul.f32 %v432, %v432
        %v593 = vmul.f32 %v433, %v433
        %v594 = vmul.f32 %v434, %v434
        %v595 = vmul.f32 %v435, %v435
        %v596 = vmul.f32 %v436, %v436
        %v597 = vmul.f32 %v437, %v437
        %v598 = vmul.f32 %v438, %v438
        %v599 = vmul.f32 %v439, %v439
        %v600 = vmul.f32 %v440, %v440
        %v601 = vmul.f32 %v441, %v441
        %v602 = vmul.f32 %v442, %v442
        %v603 = vmul.f32 %v443, %v443
        %v604 = vmul.f32 %v444, %v444
        %v605 = vmul.f32 %v445, %v445
        %v606 = vmul.f32 %v446, %v446
        %v607 = vmul.f32 %v447, %v447
        %v608 = vmul.f32 %v448, %v448
        %v609 = vmul.f32 %v449, %v449
        %v610 = vmul.f32 %v450, %v450
        %v611 = vmul.f32 %v451, %v451
        %v612 = vmul.f32 %v452, %v452
        %v613 = vmul.f32 %v453, %v453
        %v614 = vmul.f32 %v454, %v454
        %v615 = vmul.f32 %v455, %v455
        %v616 = vmul.f32 %v456, %v456
        %v617 = vmul.f32 %v457, %v457
        %v618 = vsub.f32 %v554, %v586
        %v619 = vsub.f32 %v555, %v587
        %v620 = vsub.f32 %v556, %v588
        %v621 = vsub.f32 %v557, %v589
        %v622 = vsub.f32 %v558, %v590
        %v623 = vsub.f32 %v559, %v591
        %v624 = vsub.f32 %v560, %v592
        %v625 = vsub.f32 %v561, %v593
        %v626 = vsub.f32 %v562, %v594
        %v627 = vsub.f32 %v563, %v595
        %v628 = vsub.f32 %v564, %v596
        %v629 = vsub.f32 %v565, %v597
        %v630 = vsub.f32 %v566, %v598
        %v631 = vsub.f32 %v567, %v599
        %v632 = vsub.f32 %v568, %v600
        %v633 = vsub.f32 %v569, %v601
        %v634 = vsub.f32 %v570, %v602
        %v635 = vsub.f32 %v571, %v603
        %v636 = vsub.f32 %v572, %v604
        %v637 = vsub.f32 %v573, %v605
        %v638 = vsub.f32 %v574, %v606
        %v639 = vsub.f32 %v575, %v607
        %v640 = vsub.f32 %v576, %v608
        %v641 = vsub.f32 %v577, %v609
        %v642 = vsub.f32 %v578, %v610
        %v643 = vsub.f32 %v579, %v611
        %v644 = vsub.f32 %v580, %v612
        %v645 = vsub.f32 %v581, %v613
        %v646 = vsub.f32 %v582, %v614
        %v647 = vsub.f32 %v583, %v615
        %v648 = vsub.f32 %v584, %v616
        %v649 = vsub.f32 %v585, %v617
        %v650 = vmax.f32 %v618, 0.0
        %v651 = vmax.f32 %v619, 0.0
        %v652 = vmax.f32 %v620, 0.0
        %v653 = vmax.f32 %v621, 0.0
        %v654 = vmax.f32 %v622, 0.0
        %v655 = vmax.f32 %v623, 0.0
        %v656 = vmax.f32 %v624, 0.0
        %v657 = vmax.f32 %v625, 0.0
        %v658 = vmax.f32 %v626, 0.0
        %v659 = vmax.f32 %v627, 0.0
        %v660 = vmax.f32 %v628, 0.0
        %v661 = vmax.f32 %v629, 0.0
        %v662 = vmax.f32 %v630, 0.0
        %v663 = vmax.f32 %v631, 0.0
        %v664 = vmax.f32 %v632, 0.0
        %v665 = vmax.f32 %v633, 0.0
        %v666 = vmax.f32 %v634, 0.0
        %v667 = vmax.f32 %v635, 0.0
        %v668 = vmax.f32 %v636, 0.0
        %v669 = vmax.f32 %v637, 0.0
        %v670 = vmax.f32 %v638, 0.0
        %v671 = vmax.f32 %v639, 0.0
        %v672 = vmax.f32 %v640, 0.0
        %v673 = vmax.f32 %v641, 0.0
        %v674 = vmax.f32 %v642, 0.0
        %v675 = vmax.f32 %v643, 0.0
        %v676 = vmax.f32 %v644, 0.0
        %v677 = vmax.f32 %v645, 0.0
        %v678 = vmax.f32 %v646, 0.0
        %v679 = vmax.f32 %v647, 0.0
        %v680 = vmax.f32 %v648, 0.0
        %v681 = vmax.f32 %v649, 0.0
        %v682 = vsub.f32 %v329, %v426
        %v683 = vsub.f32 %v330, %v427
        %v684 = vsub.f32 %v331, %v428
        %v685 = vsub.f32 %v332, %v429
        %v686 = vsub.f32 %v333, %v430
        %v687 = vsub.f32 %v334, %v431
        %v688 = vsub.f32 %v335, %v432
        %v689 = vsub.f32 %v336, %v433
        %v690 = vsub.f32 %v337, %v434
        %v691 = vsub.f32 %v338, %v435
        %v692 = vsub.f32 %v339, %v436
        %v693 = vsub.f32 %v340, %v437
        %v694 = vsub.f32 %v341, %v438
        %v695 = vsub.f32 %v342, %v439
        %v696 = vsub.f32 %v343, %v440
        %v697 = vsub.f32 %v344, %v441
        %v698 = vsub.f32 %v345, %v442
        %v699 = vsub.f32 %v346, %v443
        %v700 = vsub.f32 %v347, %v444
        %v701 = vsub.f32 %v348, %v445
        %v702 = vsub.f32 %v349, %v446
        %v703 = vsub.f32 %v350, %v447
        %v704 = vsub.f32 %v351, %v448
        %v705 = vsub.f32 %v352, %v449
        %v706 = vsub.f32 %v353, %v450
        %v707 = vsub.f32 %v354, %v451
        %v708 = vsub.f32 %v355, %v452
        %v709 = vsub.f32 %v356, %v453
        %v710 = vsub.f32 %v357, %v454
        %v711 = vsub.f32 %v358, %v455
        %v712 = vsub.f32 %v359, %v456
        %v713 = vsub.f32 %v360, %v457
        %v714 = vadd.f32 %v650, 1e-06
        %v715 = vadd.f32 %v651, 1e-06
        %v716 = vadd.f32 %v652, 1e-06
        %v717 = vadd.f32 %v653, 1e-06
        %v718 = vadd.f32 %v654, 1e-06
        %v719 = vadd.f32 %v655, 1e-06
        %v720 = vadd.f32 %v656, 1e-06
        %v721 = vadd.f32 %v657, 1e-06
        %v722 = vadd.f32 %v658, 1e-06
        %v723 = vadd.f32 %v659, 1e-06
        %v724 = vadd.f32 %v660, 1e-06
        %v725 = vadd.f32 %v661, 1e-06
        %v726 = vadd.f32 %v662, 1e-06
        %v727 = vadd.f32 %v663, 1e-06
        %v728 = vadd.f32 %v664, 1e-06
        %v729 = vadd.f32 %v665, 1e-06
        %v730 = vadd.f32 %v666, 1e-06
        %v731 = vadd.f32 %v667, 1e-06
        %v732 = vadd.f32 %v668, 1e-06
        %v733 = vadd.f32 %v669, 1e-06
        %v734 = vadd.f32 %v670, 1e-06
        %v735 = vadd.f32 %v671, 1e-06
        %v736 = vadd.f32 %v672, 1e-06
        %v737 = vadd.f32 %v673, 1e-06
        %v738 = vadd.f32 %v674, 1e-06
        %v739 = vadd.f32 %v675, 1e-06
        %v740 = vadd.f32 %v676, 1e-06
        %v741 = vadd.f32 %v677, 1e-06
        %v742 = vadd.f32 %v678, 1e-06
        %v743 = vadd.f32 %v679, 1e-06
        %v744 = vadd.f32 %v680, 1e-06
        %v745 = vadd.f32 %v681, 1e-06
        %v746 = vrsqrt.pop %v714
        %v747 = vrsqrt.pop %v715
        %v748 = vrsqrt.pop %v716
        %v749 = vrsqrt.pop %v717
        %v750 = vrsqrt.pop %v718
        %v751 = vrsqrt.pop %v719
        %v752 = vrsqrt.pop %v720
        %v753 = vrsqrt.pop %v721
        %v754 = vrsqrt.pop %v722
        %v755 = vrsqrt.pop %v723
        %v756 = vrsqrt.pop %v724
        %v757 = vrsqrt.pop %v725
        %v758 = vrsqrt.pop %v726
        %v759 = vrsqrt.pop %v727
        %v760 = vrsqrt.pop %v728
        %v761 = vrsqrt.pop %v729
        %v762 = vrsqrt.pop %v730
        %v763 = vrsqrt.pop %v731
        %v764 = vrsqrt.pop %v732
        %v765 = vrsqrt.pop %v733
        %v766 = vrsqrt.pop %v734
        %v767 = vrsqrt.pop %v735
        %v768 = vrsqrt.pop %v736
        %v769 = vrsqrt.pop %v737
        %v770 = vrsqrt.pop %v738
        %v771 = vrsqrt.pop %v739
        %v772 = vrsqrt.pop %v740
        %v773 = vrsqrt.pop %v741
        %v774 = vrsqrt.pop %v742
        %v775 = vrsqrt.pop %v743
        %v776 = vrsqrt.pop %v744
        %v777 = vrsqrt.pop %v745
        %v778 = vmul.f32 %v682, %v746
        %v779 = vmul.f32 %v683, %v747
        %v780 = vmul.f32 %v684, %v748
        %v781 = vmul.f32 %v685, %v749
        %v782 = vmul.f32 %v686, %v750
        %v783 = vmul.f32 %v687, %v751
        %v784 = vmul.f32 %v688, %v752
        %v785 = vmul.f32 %v689, %v753
        %v786 = vmul.f32 %v690, %v754
        %v787 = vmul.f32 %v691, %v755
        %v788 = vmul.f32 %v692, %v756
        %v789 = vmul.f32 %v693, %v757
        %v790 = vmul.f32 %v694, %v758
        %v791 = vmul.f32 %v695, %v759
        %v792 = vmul.f32 %v696, %v760
        %v793 = vmul.f32 %v697, %v761
        %v794 = vmul.f32 %v698, %v762
        %v795 = vmul.f32 %v699, %v763
        %v796 = vmul.f32 %v700, %v764
        %v797 = vmul.f32 %v701, %v765
        %v798 = vmul.f32 %v702, %v766
        %v799 = vmul.f32 %v703, %v767
        %v800 = vmul.f32 %v704, %v768
        %v801 = vmul.f32 %v705, %v769
        %v802 = vmul.f32 %v706, %v770
        %v803 = vmul.f32 %v707, %v771
        %v804 = vmul.f32 %v708, %v772
        %v805 = vmul.f32 %v709, %v773
        %v806 = vmul.f32 %v710, %v774
        %v807 = vmul.f32 %v711, %v775
        %v808 = vmul.f32 %v712, %v776
        %v809 = vmul.f32 %v713, %v777
        %v810 = vld [vmem:[%s1] sm:$0x1]
        %v812 = vlaneseq
        %v813 = vshrl.u32 %v812, 7
        %v814 = vsub.s32 0, %v813
        %v815 = vrot.slane %v810, %v814
        %v817 = vmul.f32 %v778, %v815
        %v818 = vmul.f32 %v779, %v815
        %v819 = vmul.f32 %v780, %v815
        %v820 = vmul.f32 %v781, %v815
        %v821 = vmul.f32 %v782, %v815
        %v822 = vmul.f32 %v783, %v815
        %v823 = vmul.f32 %v784, %v815
        %v824 = vmul.f32 %v785, %v815
        %v825 = vmul.f32 %v786, %v815
        %v826 = vmul.f32 %v787, %v815
        %v827 = vmul.f32 %v788, %v815
        %v828 = vmul.f32 %v789, %v815
        %v829 = vmul.f32 %v790, %v815
        %v830 = vmul.f32 %v791, %v815
        %v831 = vmul.f32 %v792, %v815
        %v832 = vmul.f32 %v793, %v815
        %v833 = vmul.f32 %v794, %v815
        %v834 = vmul.f32 %v795, %v815
        %v835 = vmul.f32 %v796, %v815
        %v836 = vmul.f32 %v797, %v815
        %v837 = vmul.f32 %v798, %v815
        %v838 = vmul.f32 %v799, %v815
        %v839 = vmul.f32 %v800, %v815
        %v840 = vmul.f32 %v801, %v815
        %v841 = vmul.f32 %v802, %v815
        %v842 = vmul.f32 %v803, %v815
        %v843 = vmul.f32 %v804, %v815
        %v844 = vmul.f32 %v805, %v815
        %v845 = vmul.f32 %v806, %v815
        %v846 = vmul.f32 %v807, %v815
        %v847 = vmul.f32 %v808, %v815
        %v848 = vmul.f32 %v809, %v815
        %v849 = vld [vmem:[%s2] sm:$0x1]
        %v851 = vlaneseq
        %v852 = vshrl.u32 %v851, 7
        %v853 = vsub.s32 0, %v852
        %v854 = vrot.slane %v849, %v853
        %v856 = vadd.f32 %v817, %v854
        %v857 = vadd.f32 %v818, %v854
        %v858 = vadd.f32 %v819, %v854
        %v859 = vadd.f32 %v820, %v854
        %v860 = vadd.f32 %v821, %v854
        %v861 = vadd.f32 %v822, %v854
        %v862 = vadd.f32 %v823, %v854
        %v863 = vadd.f32 %v824, %v854
        %v864 = vadd.f32 %v825, %v854
        %v865 = vadd.f32 %v826, %v854
        %v866 = vadd.f32 %v827, %v854
        %v867 = vadd.f32 %v828, %v854
        %v868 = vadd.f32 %v829, %v854
        %v869 = vadd.f32 %v830, %v854
        %v870 = vadd.f32 %v831, %v854
        %v871 = vadd.f32 %v832, %v854
        %v872 = vadd.f32 %v833, %v854
        %v873 = vadd.f32 %v834, %v854
        %v874 = vadd.f32 %v835, %v854
        %v875 = vadd.f32 %v836, %v854
        %v876 = vadd.f32 %v837, %v854
        %v877 = vadd.f32 %v838, %v854
        %v878 = vadd.f32 %v839, %v854
        %v879 = vadd.f32 %v840, %v854
        %v880 = vadd.f32 %v841, %v854
        %v881 = vadd.f32 %v842, %v854
        %v882 = vadd.f32 %v843, %v854
        %v883 = vadd.f32 %v844, %v854
        %v884 = vadd.f32 %v845, %v854
        %v885 = vadd.f32 %v846, %v854
        %v886 = vadd.f32 %v847, %v854
        %v887 = vadd.f32 %v848, %v854
        %v888 = vpack.c.bf16 %v857, %v856
        %v889 = vpack.c.bf16 %v859, %v858
        %v890 = vpack.c.bf16 %v861, %v860
        %v891 = vpack.c.bf16 %v863, %v862
        %v892 = vpack.c.bf16 %v865, %v864
        %v893 = vpack.c.bf16 %v867, %v866
        %v894 = vpack.c.bf16 %v869, %v868
        %v895 = vpack.c.bf16 %v871, %v870
        %v896 = vpack.c.bf16 %v873, %v872
        %v897 = vpack.c.bf16 %v875, %v874
        %v898 = vpack.c.bf16 %v877, %v876
        %v899 = vpack.c.bf16 %v879, %v878
        %v900 = vpack.c.bf16 %v881, %v880
        %v901 = vpack.c.bf16 %v883, %v882
        %v902 = vpack.c.bf16 %v885, %v884
        %v903 = vpack.c.bf16 %v887, %v886
        %v904 = vld [vmem:[#allocation5] sm:$0xff]
        %v905 = vld [vmem:[#allocation5 + $0x8] sm:$0xff]
        %v906 = vld [vmem:[#allocation5 + $0x10] sm:$0xff]
        %v907 = vld [vmem:[#allocation5 + $0x18] sm:$0xff]
        %v908 = vld [vmem:[#allocation5 + $0x20] sm:$0xff]
        %v909 = vld [vmem:[#allocation5 + $0x28] sm:$0xff]
        %v910 = vld [vmem:[#allocation5 + $0x30] sm:$0xff]
        %v911 = vld [vmem:[#allocation5 + $0x38] sm:$0xff]
        %v912 = vld [vmem:[#allocation5 + $0x40] sm:$0xff]
        %v913 = vld [vmem:[#allocation5 + $0x48] sm:$0xff]
        %v914 = vld [vmem:[#allocation5 + $0x50] sm:$0xff]
        %v915 = vld [vmem:[#allocation5 + $0x58] sm:$0xff]
        %v916 = vld [vmem:[#allocation5 + $0x60] sm:$0xff]
        %v917 = vld [vmem:[#allocation5 + $0x68] sm:$0xff]
        %v918 = vld [vmem:[#allocation5 + $0x70] sm:$0xff]
        %v919 = vld [vmem:[#allocation5 + $0x78] sm:$0xff]
        %v920 = vld [vmem:[#allocation5 + $0x80] sm:$0xff]
        %v921 = vld [vmem:[#allocation5 + $0x88] sm:$0xff]
        %v922 = vld [vmem:[#allocation5 + $0x90] sm:$0xff]
        %v923 = vld [vmem:[#allocation5 + $0x98] sm:$0xff]
        %v924 = vld [vmem:[#allocation5 + $0xa0] sm:$0xff]
        %v925 = vld [vmem:[#allocation5 + $0xa8] sm:$0xff]
        %v926 = vld [vmem:[#allocation5 + $0xb0] sm:$0xff]
        %v927 = vld [vmem:[#allocation5 + $0xb8] sm:$0xff]
        %v928 = vld [vmem:[#allocation5 + $0xc0] sm:$0xff]
        %v929 = vld [vmem:[#allocation5 + $0xc8] sm:$0xff]
        %v930 = vld [vmem:[#allocation5 + $0xd0] sm:$0xff]
        %v931 = vld [vmem:[#allocation5 + $0xd8] sm:$0xff]
        %v932 = vld [vmem:[#allocation5 + $0xe0] sm:$0xff]
        %v933 = vld [vmem:[#allocation5 + $0xe8] sm:$0xff]
        %v934 = vld [vmem:[#allocation5 + $0xf0] sm:$0xff]
        %v935 = vld [vmem:[#allocation5 + $0xf8] sm:$0xff]
        %v936 = vld [vmem:[%s4] sm:$0xf]
        %v938 = vlaneseq
        %v939 = vshrl.u32 %v938, 7
        %v940 = vsub.s32 0, %v939
        %v941 = vrot.slane %v936, %v940
        %v942 = vlaneseq
        %v943 = vshrl.u32 %v942, 7
        %v944 = vsub.s32 1, %v943
        %v945 = vrot.slane %v936, %v944
        %v946 = vlaneseq
        %v947 = vshrl.u32 %v946, 7
        %v948 = vsub.s32 2, %v947
        %v949 = vrot.slane %v936, %v948
        %v950 = vlaneseq
        %v951 = vshrl.u32 %v950, 7
        %v952 = vsub.s32 3, %v951
        %v953 = vrot.slane %v936, %v952
        %v990 = vunpack.c.l.b16 %v904
        %v991 = vunpack.c.h.b16 %v904
        %v992 = vunpack.c.l.b16 %v905
        %v993 = vunpack.c.h.b16 %v905
        %v994 = vunpack.c.l.b16 %v906
        %v995 = vunpack.c.h.b16 %v906
        %v996 = vunpack.c.l.b16 %v907
        %v997 = vunpack.c.h.b16 %v907
        %v998 = vunpack.c.l.b16 %v908
        %v999 = vunpack.c.h.b16 %v908
        %v1000 = vunpack.c.l.b16 %v909
        %v1001 = vunpack.c.h.b16 %v909
        %v1002 = vunpack.c.l.b16 %v910
        %v1003 = vunpack.c.h.b16 %v910
        %v1004 = vunpack.c.l.b16 %v911
        %v1005 = vunpack.c.h.b16 %v911
        %v1006 = vunpack.c.l.b16 %v912
        %v1007 = vunpack.c.h.b16 %v912
        %v1008 = vunpack.c.l.b16 %v913
        %v1009 = vunpack.c.h.b16 %v913
        %v1010 = vunpack.c.l.b16 %v914
        %v1011 = vunpack.c.h.b16 %v914
        %v1012 = vunpack.c.l.b16 %v915
        %v1013 = vunpack.c.h.b16 %v915
        %v1014 = vunpack.c.l.b16 %v916
        %v1015 = vunpack.c.h.b16 %v916
        %v1016 = vunpack.c.l.b16 %v917
        %v1017 = vunpack.c.h.b16 %v917
        %v1018 = vunpack.c.l.b16 %v918
        %v1019 = vunpack.c.h.b16 %v918
        %v1020 = vunpack.c.l.b16 %v919
        %v1021 = vunpack.c.h.b16 %v919
        %v1022 = vunpack.c.l.b16 %v920
        %v1023 = vunpack.c.h.b16 %v920
        %v1024 = vunpack.c.l.b16 %v921
        %v1025 = vunpack.c.h.b16 %v921
        %v1026 = vunpack.c.l.b16 %v922
        %v1027 = vunpack.c.h.b16 %v922
        %v1028 = vunpack.c.l.b16 %v923
        %v1029 = vunpack.c.h.b16 %v923
        %v1030 = vunpack.c.l.b16 %v924
        %v1031 = vunpack.c.h.b16 %v924
        %v1032 = vunpack.c.l.b16 %v925
        %v1033 = vunpack.c.h.b16 %v925
        %v1034 = vunpack.c.l.b16 %v926
        %v1035 = vunpack.c.h.b16 %v926
        %v1036 = vunpack.c.l.b16 %v927
        %v1037 = vunpack.c.h.b16 %v927
        %v1038 = vunpack.c.l.b16 %v928
        %v1039 = vunpack.c.h.b16 %v928
        %v1040 = vunpack.c.l.b16 %v929
        %v1041 = vunpack.c.h.b16 %v929
        %v1042 = vunpack.c.l.b16 %v930
        %v1043 = vunpack.c.h.b16 %v930
        %v1044 = vunpack.c.l.b16 %v931
        %v1045 = vunpack.c.h.b16 %v931
        %v1046 = vunpack.c.l.b16 %v932
        %v1047 = vunpack.c.h.b16 %v932
        %v1048 = vunpack.c.l.b16 %v933
        %v1049 = vunpack.c.h.b16 %v933
        %v1050 = vunpack.c.l.b16 %v934
        %v1051 = vunpack.c.h.b16 %v934
        %v1052 = vunpack.c.l.b16 %v935
        %v1053 = vunpack.c.h.b16 %v935
        %v1054 = vpack.c.b16 %v994, %v990
        %v1055 = vpack.c.b16 %v995, %v991
        %v1056 = vpack.c.b16 %v996, %v992
        %v1057 = vpack.c.b16 %v997, %v993
        %v1058 = vpack.c.b16 %v1002, %v998
        %v1059 = vpack.c.b16 %v1003, %v999
        %v1060 = vpack.c.b16 %v1004, %v1000
        %v1061 = vpack.c.b16 %v1005, %v1001
        %v1062 = vpack.c.b16 %v1010, %v1006
        %v1063 = vpack.c.b16 %v1011, %v1007
        %v1064 = vpack.c.b16 %v1012, %v1008
        %v1065 = vpack.c.b16 %v1013, %v1009
        %v1066 = vpack.c.b16 %v1018, %v1014
        %v1067 = vpack.c.b16 %v1019, %v1015
        %v1068 = vpack.c.b16 %v1020, %v1016
        %v1069 = vpack.c.b16 %v1021, %v1017
        %v1070 = vpack.c.b16 %v1026, %v1022
        %v1071 = vpack.c.b16 %v1027, %v1023
        %v1072 = vpack.c.b16 %v1028, %v1024
        %v1073 = vpack.c.b16 %v1029, %v1025
        %v1074 = vpack.c.b16 %v1034, %v1030
        %v1075 = vpack.c.b16 %v1035, %v1031
        %v1076 = vpack.c.b16 %v1036, %v1032
        %v1077 = vpack.c.b16 %v1037, %v1033
        %v1078 = vpack.c.b16 %v1042, %v1038
        %v1079 = vpack.c.b16 %v1043, %v1039
        %v1080 = vpack.c.b16 %v1044, %v1040
        %v1081 = vpack.c.b16 %v1045, %v1041
        %v1082 = vpack.c.b16 %v1050, %v1046
        %v1083 = vpack.c.b16 %v1051, %v1047
        %v1084 = vpack.c.b16 %v1052, %v1048
        %v1085 = vpack.c.b16 %v1053, %v1049
        %1118 = vmatprep.subr.bf16.mxu0 %v1083
        %1119 = vmatpush1.bf16.msra.mxu0 %v1082
        %1120 = vmatprep.subr.bf16.mxu0 %v1079
        %1121 = vmatpush1.bf16.msra.mxu0 %v1078
        %1122 = vmatprep.subr.bf16.mxu0 %v1075
        %1123 = vmatpush1.bf16.msra.mxu0 %v1074
        %1124 = vmatprep.subr.bf16.mxu0 %v1071
        %1125 = vmatpush1.bf16.msra.mxu0 %v1070
        %1126 = vmatprep.subr.bf16.mxu0 %v1067
        %1127 = vmatpush1.bf16.msra.mxu0 %v1066
        %1128 = vmatprep.subr.bf16.mxu0 %v1063
        %1129 = vmatpush1.bf16.msra.mxu0 %v1062
        %1130 = vmatprep.subr.bf16.mxu0 %v1059
        %1131 = vmatpush1.bf16.msra.mxu0 %v1058
        %1132 = vmatprep.subr.bf16.mxu0 %v1055
        %1133 = vmatpush1.bf16.msra.mxu0 %v1054
        %1134 = vmatprep.subr.bf16.mxu0 0
        %1135 = vmatpush2.bf16.msra.mxu0 0
        %1136 = vmatprep.subr.bf16.mxu0 0
        %1137 = vmatpush2.bf16.msra.mxu0 0
        %1138 = vmatprep.subr.bf16.mxu0 0
        %1139 = vmatpush2.bf16.msra.mxu0 0
        %1140 = vmatprep.subr.bf16.mxu0 0
        %1141 = vmatpush2.bf16.msra.mxu0 0
        %1142 = vmatprep.subr.bf16.mxu0 0
        %1143 = vmatpush2.bf16.msra.mxu0 0
        %1144 = vmatprep.subr.bf16.mxu0 0
        %1145 = vmatpush2.bf16.msra.mxu0 0
        %1146 = vmatprep.subr.bf16.mxu0 0
        %1147 = vmatpush2.bf16.msra.mxu0 0
        %1148 = vmatprep.subr.bf16.mxu0 0
        %1149 = vmatpush2.bf16.msra.mxu0 0
        %1150 = vmatprep.mubr.bf16.mxu0 0
        %1151 = vmatmul.mubr.bf16.gmra.mxu0 %v888
        %v1152 = vpop.f32.mrf.mxu0
        %v1153 = vadd.f32 %v941, %v1152
        %v1154 = vpop.f32.mrf.mxu0
        %v1155 = vadd.f32 %v945, %v1154
        %v1156 = vpop.f32.mrf.mxu0
        %v1157 = vadd.f32 %v941, %v1156
        %v1158 = vpop.f32.mrf.mxu0
        %v1159 = vadd.f32 %v945, %v1158
        %1160 = vmatprep.mubr.bf16.mxu0 0
        %1161 = vmatmul.mubr.bf16.gmra.mxu0 %v889
        %v1162 = vpop.f32.mrf.mxu0
        %v1163 = vadd.f32 %v941, %v1162
        %v1164 = vpop.f32.mrf.mxu0
        %v1165 = vadd.f32 %v945, %v1164
        %v1166 = vpop.f32.mrf.mxu0
        %v1167 = vadd.f32 %v941, %v1166
        %v1168 = vpop.f32.mrf.mxu0
        %v1169 = vadd.f32 %v945, %v1168
        %1170 = vmatprep.mubr.bf16.mxu0 0
        %1171 = vmatmul.mubr.bf16.gmra.mxu0 %v890
        %v1172 = vpop.f32.mrf.mxu0
        %v1173 = vadd.f32 %v941, %v1172
        %v1174 = vpop.f32.mrf.mxu0
        %v1175 = vadd.f32 %v945, %v1174
        %v1176 = vpop.f32.mrf.mxu0
        %v1177 = vadd.f32 %v941, %v1176
        %v1178 = vpop.f32.mrf.mxu0
        %v1179 = vadd.f32 %v945, %v1178
        %1180 = vmatprep.mubr.bf16.mxu0 0
        %1181 = vmatmul.mubr.bf16.gmra.mxu0 %v891
        %v1182 = vpop.f32.mrf.mxu0
        %v1183 = vadd.f32 %v941, %v1182
        %v1184 = vpop.f32.mrf.mxu0
        %v1185 = vadd.f32 %v945, %v1184
        %v1186 = vpop.f32.mrf.mxu0
        %v1187 = vadd.f32 %v941, %v1186
        %v1188 = vpop.f32.mrf.mxu0
        %v1189 = vadd.f32 %v945, %v1188
        %1190 = vmatprep.mubr.bf16.mxu0 0
        %1191 = vmatmul.mubr.bf16.gmra.mxu0 %v892
        %v1192 = vpop.f32.mrf.mxu0
        %v1193 = vadd.f32 %v941, %v1192
        %v1194 = vpop.f32.mrf.mxu0
        %v1195 = vadd.f32 %v945, %v1194
        %v1196 = vpop.f32.mrf.mxu0
        %v1197 = vadd.f32 %v941, %v1196
        %v1198 = vpop.f32.mrf.mxu0
        %v1199 = vadd.f32 %v945, %v1198
        %1200 = vmatprep.mubr.bf16.mxu0 0
        %1201 = vmatmul.mubr.bf16.gmra.mxu0 %v893
        %v1202 = vpop.f32.mrf.mxu0
        %v1203 = vadd.f32 %v941, %v1202
        %v1204 = vpop.f32.mrf.mxu0
        %v1205 = vadd.f32 %v945, %v1204
        %v1206 = vpop.f32.mrf.mxu0
        %v1207 = vadd.f32 %v941, %v1206
        %v1208 = vpop.f32.mrf.mxu0
        %v1209 = vadd.f32 %v945, %v1208
        %1210 = vmatprep.mubr.bf16.mxu0 0
        %1211 = vmatmul.mubr.bf16.gmra.mxu0 %v894
        %v1212 = vpop.f32.mrf.mxu0
        %v1213 = vadd.f32 %v941, %v1212
        %v1214 = vpop.f32.mrf.mxu0
        %v1215 = vadd.f32 %v945, %v1214
        %v1216 = vpop.f32.mrf.mxu0
        %v1217 = vadd.f32 %v941, %v1216
        %v1218 = vpop.f32.mrf.mxu0
        %v1219 = vadd.f32 %v945, %v1218
        %1220 = vmatprep.mubr.bf16.mxu0 0
        %1221 = vmatmul.mubr.bf16.gmra.mxu0 %v895
        %v1222 = vpop.f32.mrf.mxu0
        %v1223 = vadd.f32 %v941, %v1222
        %v1224 = vpop.f32.mrf.mxu0
        %v1225 = vadd.f32 %v945, %v1224
        %v1226 = vpop.f32.mrf.mxu0
        %v1227 = vadd.f32 %v941, %v1226
        %v1228 = vpop.f32.mrf.mxu0
        %v1229 = vadd.f32 %v945, %v1228
        %1230 = vmatprep.mubr.bf16.mxu0 0
        %1231 = vmatmul.mubr.bf16.gmra.mxu0 %v896
        %v1232 = vpop.f32.mrf.mxu0
        %v1233 = vadd.f32 %v941, %v1232
        %v1234 = vpop.f32.mrf.mxu0
        %v1235 = vadd.f32 %v945, %v1234
        %v1236 = vpop.f32.mrf.mxu0
        %v1237 = vadd.f32 %v941, %v1236
        %v1238 = vpop.f32.mrf.mxu0
        %v1239 = vadd.f32 %v945, %v1238
        %1240 = vmatprep.mubr.bf16.mxu0 0
        %1241 = vmatmul.mubr.bf16.gmra.mxu0 %v897
        %v1242 = vpop.f32.mrf.mxu0
        %v1243 = vadd.f32 %v941, %v1242
        %v1244 = vpop.f32.mrf.mxu0
        %v1245 = vadd.f32 %v945, %v1244
        %v1246 = vpop.f32.mrf.mxu0
        %v1247 = vadd.f32 %v941, %v1246
        %v1248 = vpop.f32.mrf.mxu0
        %v1249 = vadd.f32 %v945, %v1248
        %1250 = vmatprep.mubr.bf16.mxu0 0
        %1251 = vmatmul.mubr.bf16.gmra.mxu0 %v898
        %v1252 = vpop.f32.mrf.mxu0
        %v1253 = vadd.f32 %v941, %v1252
        %v1254 = vpop.f32.mrf.mxu0
        %v1255 = vadd.f32 %v945, %v1254
        %v1256 = vpop.f32.mrf.mxu0
        %v1257 = vadd.f32 %v941, %v1256
        %v1258 = vpop.f32.mrf.mxu0
        %v1259 = vadd.f32 %v945, %v1258
        %1260 = vmatprep.mubr.bf16.mxu0 0
        %1261 = vmatmul.mubr.bf16.gmra.mxu0 %v899
        %v1262 = vpop.f32.mrf.mxu0
        %v1263 = vadd.f32 %v941, %v1262
        %v1264 = vpop.f32.mrf.mxu0
        %v1265 = vadd.f32 %v945, %v1264
        %v1266 = vpop.f32.mrf.mxu0
        %v1267 = vadd.f32 %v941, %v1266
        %v1268 = vpop.f32.mrf.mxu0
        %v1269 = vadd.f32 %v945, %v1268
        %1270 = vmatprep.mubr.bf16.mxu0 0
        %1271 = vmatmul.mubr.bf16.gmra.mxu0 %v900
        %v1272 = vpop.f32.mrf.mxu0
        %v1273 = vadd.f32 %v941, %v1272
        %v1274 = vpop.f32.mrf.mxu0
        %v1275 = vadd.f32 %v945, %v1274
        %v1276 = vpop.f32.mrf.mxu0
        %v1277 = vadd.f32 %v941, %v1276
        %v1278 = vpop.f32.mrf.mxu0
        %v1279 = vadd.f32 %v945, %v1278
        %1280 = vmatprep.mubr.bf16.mxu0 0
        %1281 = vmatmul.mubr.bf16.gmra.mxu0 %v901
        %v1282 = vpop.f32.mrf.mxu0
        %v1283 = vadd.f32 %v941, %v1282
        %v1284 = vpop.f32.mrf.mxu0
        %v1285 = vadd.f32 %v945, %v1284
        %v1286 = vpop.f32.mrf.mxu0
        %v1287 = vadd.f32 %v941, %v1286
        %v1288 = vpop.f32.mrf.mxu0
        %v1289 = vadd.f32 %v945, %v1288
        %1290 = vmatprep.mubr.bf16.mxu0 0
        %1291 = vmatmul.mubr.bf16.gmra.mxu0 %v902
        %v1292 = vpop.f32.mrf.mxu0
        %v1293 = vadd.f32 %v941, %v1292
        %v1294 = vpop.f32.mrf.mxu0
        %v1295 = vadd.f32 %v945, %v1294
        %v1296 = vpop.f32.mrf.mxu0
        %v1297 = vadd.f32 %v941, %v1296
        %v1298 = vpop.f32.mrf.mxu0
        %v1299 = vadd.f32 %v945, %v1298
        %1300 = vmatprep.mubr.bf16.mxu0 0
        %1301 = vmatmul.mubr.bf16.gmra.mxu0 %v903
        %v1302 = vpop.f32.mrf.mxu0
        %v1303 = vadd.f32 %v941, %v1302
        %v1304 = vpop.f32.mrf.mxu0
        %v1305 = vadd.f32 %v945, %v1304
        %v1306 = vpop.f32.mrf.mxu0
        %v1307 = vadd.f32 %v941, %v1306
        %v1308 = vpop.f32.mrf.mxu0
        %v1309 = vadd.f32 %v945, %v1308
        %1310 = vdwg.mxu0
        %1311 = vmatprep.subr.bf16.mxu0 %v1085
        %1312 = vmatpush1.bf16.msra.mxu0 %v1084
        %1313 = vmatprep.subr.bf16.mxu0 %v1081
        %1314 = vmatpush1.bf16.msra.mxu0 %v1080
        %1315 = vmatprep.subr.bf16.mxu0 %v1077
        %1316 = vmatpush1.bf16.msra.mxu0 %v1076
        %1317 = vmatprep.subr.bf16.mxu0 %v1073
        %1318 = vmatpush1.bf16.msra.mxu0 %v1072
        %1319 = vmatprep.subr.bf16.mxu0 %v1069
        %1320 = vmatpush1.bf16.msra.mxu0 %v1068
        %1321 = vmatprep.subr.bf16.mxu0 %v1065
        %1322 = vmatpush1.bf16.msra.mxu0 %v1064
        %1323 = vmatprep.subr.bf16.mxu0 %v1061
        %1324 = vmatpush1.bf16.msra.mxu0 %v1060
        %1325 = vmatprep.subr.bf16.mxu0 %v1057
        %1326 = vmatpush1.bf16.msra.mxu0 %v1056
        %1327 = vmatprep.subr.bf16.mxu0 0
        %1328 = vmatpush2.bf16.msra.mxu0 0
        %1329 = vmatprep.subr.bf16.mxu0 0
        %1330 = vmatpush2.bf16.msra.mxu0 0
        %1331 = vmatprep.subr.bf16.mxu0 0
        %1332 = vmatpush2.bf16.msra.mxu0 0
        %1333 = vmatprep.subr.bf16.mxu0 0
        %1334 = vmatpush2.bf16.msra.mxu0 0
        %1335 = vmatprep.subr.bf16.mxu0 0
        %1336 = vmatpush2.bf16.msra.mxu0 0
        %1337 = vmatprep.subr.bf16.mxu0 0
        %1338 = vmatpush2.bf16.msra.mxu0 0
        %1339 = vmatprep.subr.bf16.mxu0 0
        %1340 = vmatpush2.bf16.msra.mxu0 0
        %1341 = vmatprep.subr.bf16.mxu0 0
        %1342 = vmatpush2.bf16.msra.mxu0 0
        %1343 = vmatprep.mubr.bf16.mxu0 0
        %1344 = vmatmul.mubr.bf16.gmra.mxu0 %v888
        %v1345 = vpop.f32.mrf.mxu0
        %v1346 = vadd.f32 %v949, %v1345
        %v1347 = vpop.f32.mrf.mxu0
        %v1348 = vadd.f32 %v953, %v1347
        %v1349 = vpop.f32.mrf.mxu0
        %v1350 = vadd.f32 %v949, %v1349
        %v1351 = vpop.f32.mrf.mxu0
        %v1352 = vadd.f32 %v953, %v1351
        %1353 = vmatprep.mubr.bf16.mxu0 0
        %1354 = vmatmul.mubr.bf16.gmra.mxu0 %v889
        %v1355 = vpop.f32.mrf.mxu0
        %v1356 = vadd.f32 %v949, %v1355
        %v1357 = vpop.f32.mrf.mxu0
        %v1358 = vadd.f32 %v953, %v1357
        %v1359 = vpop.f32.mrf.mxu0
        %v1360 = vadd.f32 %v949, %v1359
        %v1361 = vpop.f32.mrf.mxu0
        %v1362 = vadd.f32 %v953, %v1361
        %1363 = vmatprep.mubr.bf16.mxu0 0
        %1364 = vmatmul.mubr.bf16.gmra.mxu0 %v890
        %v1365 = vpop.f32.mrf.mxu0
        %v1366 = vadd.f32 %v949, %v1365
        %v1367 = vpop.f32.mrf.mxu0
        %v1368 = vadd.f32 %v953, %v1367
        %v1369 = vpop.f32.mrf.mxu0
        %v1370 = vadd.f32 %v949, %v1369
        %v1371 = vpop.f32.mrf.mxu0
        %v1372 = vadd.f32 %v953, %v1371
        %1373 = vmatprep.mubr.bf16.mxu0 0
        %1374 = vmatmul.mubr.bf16.gmra.mxu0 %v891
        %v1375 = vpop.f32.mrf.mxu0
        %v1376 = vadd.f32 %v949, %v1375
        %v1377 = vpop.f32.mrf.mxu0
        %v1378 = vadd.f32 %v953, %v1377
        %v1379 = vpop.f32.mrf.mxu0
        %v1380 = vadd.f32 %v949, %v1379
        %v1381 = vpop.f32.mrf.mxu0
        %v1382 = vadd.f32 %v953, %v1381
        %1383 = vmatprep.mubr.bf16.mxu0 0
        %1384 = vmatmul.mubr.bf16.gmra.mxu0 %v892
        %v1385 = vpop.f32.mrf.mxu0
        %v1386 = vadd.f32 %v949, %v1385
        %v1387 = vpop.f32.mrf.mxu0
        %v1388 = vadd.f32 %v953, %v1387
        %v1389 = vpop.f32.mrf.mxu0
        %v1390 = vadd.f32 %v949, %v1389
        %v1391 = vpop.f32.mrf.mxu0
        %v1392 = vadd.f32 %v953, %v1391
        %1393 = vmatprep.mubr.bf16.mxu0 0
        %1394 = vmatmul.mubr.bf16.gmra.mxu0 %v893
        %v1395 = vpop.f32.mrf.mxu0
        %v1396 = vadd.f32 %v949, %v1395
        %v1397 = vpop.f32.mrf.mxu0
        %v1398 = vadd.f32 %v953, %v1397
        %v1399 = vpop.f32.mrf.mxu0
        %v1400 = vadd.f32 %v949, %v1399
        %v1401 = vpop.f32.mrf.mxu0
        %v1402 = vadd.f32 %v953, %v1401
        %1403 = vmatprep.mubr.bf16.mxu0 0
        %1404 = vmatmul.mubr.bf16.gmra.mxu0 %v894
        %v1405 = vpop.f32.mrf.mxu0
        %v1406 = vadd.f32 %v949, %v1405
        %v1407 = vpop.f32.mrf.mxu0
        %v1408 = vadd.f32 %v953, %v1407
        %v1409 = vpop.f32.mrf.mxu0
        %v1410 = vadd.f32 %v949, %v1409
        %v1411 = vpop.f32.mrf.mxu0
        %v1412 = vadd.f32 %v953, %v1411
        %1413 = vmatprep.mubr.bf16.mxu0 0
        %1414 = vmatmul.mubr.bf16.gmra.mxu0 %v895
        %v1415 = vpop.f32.mrf.mxu0
        %v1416 = vadd.f32 %v949, %v1415
        %v1417 = vpop.f32.mrf.mxu0
        %v1418 = vadd.f32 %v953, %v1417
        %v1419 = vpop.f32.mrf.mxu0
        %v1420 = vadd.f32 %v949, %v1419
        %v1421 = vpop.f32.mrf.mxu0
        %v1422 = vadd.f32 %v953, %v1421
        %1423 = vmatprep.mubr.bf16.mxu0 0
        %1424 = vmatmul.mubr.bf16.gmra.mxu0 %v896
        %v1425 = vpop.f32.mrf.mxu0
        %v1426 = vadd.f32 %v949, %v1425
        %v1427 = vpop.f32.mrf.mxu0
        %v1428 = vadd.f32 %v953, %v1427
        %v1429 = vpop.f32.mrf.mxu0
        %v1430 = vadd.f32 %v949, %v1429
        %v1431 = vpop.f32.mrf.mxu0
        %v1432 = vadd.f32 %v953, %v1431
        %1433 = vmatprep.mubr.bf16.mxu0 0
        %1434 = vmatmul.mubr.bf16.gmra.mxu0 %v897
        %v1435 = vpop.f32.mrf.mxu0
        %v1436 = vadd.f32 %v949, %v1435
        %v1437 = vpop.f32.mrf.mxu0
        %v1438 = vadd.f32 %v953, %v1437
        %v1439 = vpop.f32.mrf.mxu0
        %v1440 = vadd.f32 %v949, %v1439
        %v1441 = vpop.f32.mrf.mxu0
        %v1442 = vadd.f32 %v953, %v1441
        %1443 = vmatprep.mubr.bf16.mxu0 0
        %1444 = vmatmul.mubr.bf16.gmra.mxu0 %v898
        %v1445 = vpop.f32.mrf.mxu0
        %v1446 = vadd.f32 %v949, %v1445
        %v1447 = vpop.f32.mrf.mxu0
        %v1448 = vadd.f32 %v953, %v1447
        %v1449 = vpop.f32.mrf.mxu0
        %v1450 = vadd.f32 %v949, %v1449
        %v1451 = vpop.f32.mrf.mxu0
        %v1452 = vadd.f32 %v953, %v1451
        %1453 = vmatprep.mubr.bf16.mxu0 0
        %1454 = vmatmul.mubr.bf16.gmra.mxu0 %v899
        %v1455 = vpop.f32.mrf.mxu0
        %v1456 = vadd.f32 %v949, %v1455
        %v1457 = vpop.f32.mrf.mxu0
        %v1458 = vadd.f32 %v953, %v1457
        %v1459 = vpop.f32.mrf.mxu0
        %v1460 = vadd.f32 %v949, %v1459
        %v1461 = vpop.f32.mrf.mxu0
        %v1462 = vadd.f32 %v953, %v1461
        %1463 = vmatprep.mubr.bf16.mxu0 0
        %1464 = vmatmul.mubr.bf16.gmra.mxu0 %v900
        %v1465 = vpop.f32.mrf.mxu0
        %v1466 = vadd.f32 %v949, %v1465
        %v1467 = vpop.f32.mrf.mxu0
        %v1468 = vadd.f32 %v953, %v1467
        %v1469 = vpop.f32.mrf.mxu0
        %v1470 = vadd.f32 %v949, %v1469
        %v1471 = vpop.f32.mrf.mxu0
        %v1472 = vadd.f32 %v953, %v1471
        %1473 = vmatprep.mubr.bf16.mxu0 0
        %1474 = vmatmul.mubr.bf16.gmra.mxu0 %v901
        %v1475 = vpop.f32.mrf.mxu0
        %v1476 = vadd.f32 %v949, %v1475
        %v1477 = vpop.f32.mrf.mxu0
        %v1478 = vadd.f32 %v953, %v1477
        %v1479 = vpop.f32.mrf.mxu0
        %v1480 = vadd.f32 %v949, %v1479
        %v1481 = vpop.f32.mrf.mxu0
        %v1482 = vadd.f32 %v953, %v1481
        %1483 = vmatprep.mubr.bf16.mxu0 0
        %1484 = vmatmul.mubr.bf16.gmra.mxu0 %v902
        %v1485 = vpop.f32.mrf.mxu0
        %v1486 = vadd.f32 %v949, %v1485
        %v1487 = vpop.f32.mrf.mxu0
        %v1488 = vadd.f32 %v953, %v1487
        %v1489 = vpop.f32.mrf.mxu0
        %v1490 = vadd.f32 %v949, %v1489
        %v1491 = vpop.f32.mrf.mxu0
        %v1492 = vadd.f32 %v953, %v1491
        %1493 = vmatprep.mubr.bf16.mxu0 0
        %1494 = vmatmul.mubr.bf16.gmra.mxu0 %v903
        %v1495 = vpop.f32.mrf.mxu0
        %v1496 = vadd.f32 %v949, %v1495
        %v1497 = vpop.f32.mrf.mxu0
        %v1498 = vadd.f32 %v953, %v1497
        %v1499 = vpop.f32.mrf.mxu0
        %v1500 = vadd.f32 %v949, %v1499
        %v1501 = vpop.f32.mrf.mxu0
        %v1502 = vadd.f32 %v953, %v1501
        %1503 = vdwg.mxu0
        %v1504 = vmax.f32 %v1153, 0.0
        %v1505 = vmax.f32 %v1155, 0.0
        %v1506 = vmax.f32 %v1346, 0.0
        %v1507 = vmax.f32 %v1348, 0.0
        %v1508 = vmax.f32 %v1157, 0.0
        %v1509 = vmax.f32 %v1159, 0.0
        %v1510 = vmax.f32 %v1350, 0.0
        %v1511 = vmax.f32 %v1352, 0.0
        %v1512 = vmax.f32 %v1163, 0.0
        %v1513 = vmax.f32 %v1165, 0.0
        %v1514 = vmax.f32 %v1356, 0.0
        %v1515 = vmax.f32 %v1358, 0.0
        %v1516 = vmax.f32 %v1167, 0.0
        %v1517 = vmax.f32 %v1169, 0.0
        %v1518 = vmax.f32 %v1360, 0.0
        %v1519 = vmax.f32 %v1362, 0.0
        %v1520 = vmax.f32 %v1173, 0.0
        %v1521 = vmax.f32 %v1175, 0.0
        %v1522 = vmax.f32 %v1366, 0.0
        %v1523 = vmax.f32 %v1368, 0.0
        %v1524 = vmax.f32 %v1177, 0.0
        %v1525 = vmax.f32 %v1179, 0.0
        %v1526 = vmax.f32 %v1370, 0.0
        %v1527 = vmax.f32 %v1372, 0.0
        %v1528 = vmax.f32 %v1183, 0.0
        %v1529 = vmax.f32 %v1185, 0.0
        %v1530 = vmax.f32 %v1376, 0.0
        %v1531 = vmax.f32 %v1378, 0.0
        %v1532 = vmax.f32 %v1187, 0.0
        %v1533 = vmax.f32 %v1189, 0.0
        %v1534 = vmax.f32 %v1380, 0.0
        %v1535 = vmax.f32 %v1382, 0.0
        %v1536 = vmax.f32 %v1193, 0.0
        %v1537 = vmax.f32 %v1195, 0.0
        %v1538 = vmax.f32 %v1386, 0.0
        %v1539 = vmax.f32 %v1388, 0.0
        %v1540 = vmax.f32 %v1197, 0.0
        %v1541 = vmax.f32 %v1199, 0.0
        %v1542 = vmax.f32 %v1390, 0.0
        %v1543 = vmax.f32 %v1392, 0.0
        %v1544 = vmax.f32 %v1203, 0.0
        %v1545 = vmax.f32 %v1205, 0.0
        %v1546 = vmax.f32 %v1396, 0.0
        %v1547 = vmax.f32 %v1398, 0.0
        %v1548 = vmax.f32 %v1207, 0.0
        %v1549 = vmax.f32 %v1209, 0.0
        %v1550 = vmax.f32 %v1400, 0.0
        %v1551 = vmax.f32 %v1402, 0.0
        %v1552 = vmax.f32 %v1213, 0.0
        %v1553 = vmax.f32 %v1215, 0.0
        %v1554 = vmax.f32 %v1406, 0.0
        %v1555 = vmax.f32 %v1408, 0.0
        %v1556 = vmax.f32 %v1217, 0.0
        %v1557 = vmax.f32 %v1219, 0.0
        %v1558 = vmax.f32 %v1410, 0.0
        %v1559 = vmax.f32 %v1412, 0.0
        %v1560 = vmax.f32 %v1223, 0.0
        %v1561 = vmax.f32 %v1225, 0.0
        %v1562 = vmax.f32 %v1416, 0.0
        %v1563 = vmax.f32 %v1418, 0.0
        %v1564 = vmax.f32 %v1227, 0.0
        %v1565 = vmax.f32 %v1229, 0.0
        %v1566 = vmax.f32 %v1420, 0.0
        %v1567 = vmax.f32 %v1422, 0.0
        %v1568 = vmax.f32 %v1233, 0.0
        %v1569 = vmax.f32 %v1235, 0.0
        %v1570 = vmax.f32 %v1426, 0.0
        %v1571 = vmax.f32 %v1428, 0.0
        %v1572 = vmax.f32 %v1237, 0.0
        %v1573 = vmax.f32 %v1239, 0.0
        %v1574 = vmax.f32 %v1430, 0.0
        %v1575 = vmax.f32 %v1432, 0.0
        %v1576 = vmax.f32 %v1243, 0.0
        %v1577 = vmax.f32 %v1245, 0.0
        %v1578 = vmax.f32 %v1436, 0.0
        %v1579 = vmax.f32 %v1438, 0.0
        %v1580 = vmax.f32 %v1247, 0.0
        %v1581 = vmax.f32 %v1249, 0.0
        %v1582 = vmax.f32 %v1440, 0.0
        %v1583 = vmax.f32 %v1442, 0.0
        %v1584 = vmax.f32 %v1253, 0.0
        %v1585 = vmax.f32 %v1255, 0.0
        %v1586 = vmax.f32 %v1446, 0.0
        %v1587 = vmax.f32 %v1448, 0.0
        %v1588 = vmax.f32 %v1257, 0.0
        %v1589 = vmax.f32 %v1259, 0.0
        %v1590 = vmax.f32 %v1450, 0.0
        %v1591 = vmax.f32 %v1452, 0.0
        %v1592 = vmax.f32 %v1263, 0.0
        %v1593 = vmax.f32 %v1265, 0.0
        %v1594 = vmax.f32 %v1456, 0.0
        %v1595 = vmax.f32 %v1458, 0.0
        %v1596 = vmax.f32 %v1267, 0.0
        %v1597 = vmax.f32 %v1269, 0.0
        %v1598 = vmax.f32 %v1460, 0.0
        %v1599 = vmax.f32 %v1462, 0.0
        %v1600 = vmax.f32 %v1273, 0.0
        %v1601 = vmax.f32 %v1275, 0.0
        %v1602 = vmax.f32 %v1466, 0.0
        %v1603 = vmax.f32 %v1468, 0.0
        %v1604 = vmax.f32 %v1277, 0.0
        %v1605 = vmax.f32 %v1279, 0.0
        %v1606 = vmax.f32 %v1470, 0.0
        %v1607 = vmax.f32 %v1472, 0.0
        %v1608 = vmax.f32 %v1283, 0.0
        %v1609 = vmax.f32 %v1285, 0.0
        %v1610 = vmax.f32 %v1476, 0.0
        %v1611 = vmax.f32 %v1478, 0.0
        %v1612 = vmax.f32 %v1287, 0.0
        %v1613 = vmax.f32 %v1289, 0.0
        %v1614 = vmax.f32 %v1480, 0.0
        %v1615 = vmax.f32 %v1482, 0.0
        %v1616 = vmax.f32 %v1293, 0.0
        %v1617 = vmax.f32 %v1295, 0.0
        %v1618 = vmax.f32 %v1486, 0.0
        %v1619 = vmax.f32 %v1488, 0.0
        %v1620 = vmax.f32 %v1297, 0.0
        %v1621 = vmax.f32 %v1299, 0.0
        %v1622 = vmax.f32 %v1490, 0.0
        %v1623 = vmax.f32 %v1492, 0.0
        %v1624 = vmax.f32 %v1303, 0.0
        %v1625 = vmax.f32 %v1305, 0.0
        %v1626 = vmax.f32 %v1496, 0.0
        %v1627 = vmax.f32 %v1498, 0.0
        %v1628 = vmax.f32 %v1307, 0.0
        %v1629 = vmax.f32 %v1309, 0.0
        %v1630 = vmax.f32 %v1500, 0.0
        %v1631 = vmax.f32 %v1502, 0.0
        %v1632 = vpack.c.bf16 %v1508, %v1504
        %v1633 = vpack.c.bf16 %v1509, %v1505
        %v1634 = vpack.c.bf16 %v1510, %v1506
        %v1635 = vpack.c.bf16 %v1511, %v1507
        %v1636 = vpack.c.bf16 %v1516, %v1512
        %v1637 = vpack.c.bf16 %v1517, %v1513
        %v1638 = vpack.c.bf16 %v1518, %v1514
        %v1639 = vpack.c.bf16 %v1519, %v1515
        %v1640 = vpack.c.bf16 %v1524, %v1520
        %v1641 = vpack.c.bf16 %v1525, %v1521
        %v1642 = vpack.c.bf16 %v1526, %v1522
        %v1643 = vpack.c.bf16 %v1527, %v1523
        %v1644 = vpack.c.bf16 %v1532, %v1528
        %v1645 = vpack.c.bf16 %v1533, %v1529
        %v1646 = vpack.c.bf16 %v1534, %v1530
        %v1647 = vpack.c.bf16 %v1535, %v1531
        %v1648 = vpack.c.bf16 %v1540, %v1536
        %v1649 = vpack.c.bf16 %v1541, %v1537
        %v1650 = vpack.c.bf16 %v1542, %v1538
        %v1651 = vpack.c.bf16 %v1543, %v1539
        %v1652 = vpack.c.bf16 %v1548, %v1544
        %v1653 = vpack.c.bf16 %v1549, %v1545
        %v1654 = vpack.c.bf16 %v1550, %v1546
        %v1655 = vpack.c.bf16 %v1551, %v1547
        %v1656 = vpack.c.bf16 %v1556, %v1552
        %v1657 = vpack.c.bf16 %v1557, %v1553
        %v1658 = vpack.c.bf16 %v1558, %v1554
        %v1659 = vpack.c.bf16 %v1559, %v1555
        %v1660 = vpack.c.bf16 %v1564, %v1560
        %v1661 = vpack.c.bf16 %v1565, %v1561
        %v1662 = vpack.c.bf16 %v1566, %v1562
        %v1663 = vpack.c.bf16 %v1567, %v1563
        %v1664 = vpack.c.bf16 %v1572, %v1568
        %v1665 = vpack.c.bf16 %v1573, %v1569
        %v1666 = vpack.c.bf16 %v1574, %v1570
        %v1667 = vpack.c.bf16 %v1575, %v1571
        %v1668 = vpack.c.bf16 %v1580, %v1576
        %v1669 = vpack.c.bf16 %v1581, %v1577
        %v1670 = vpack.c.bf16 %v1582, %v1578
        %v1671 = vpack.c.bf16 %v1583, %v1579
        %v1672 = vpack.c.bf16 %v1588, %v1584
        %v1673 = vpack.c.bf16 %v1589, %v1585
        %v1674 = vpack.c.bf16 %v1590, %v1586
        %v1675 = vpack.c.bf16 %v1591, %v1587
        %v1676 = vpack.c.bf16 %v1596, %v1592
        %v1677 = vpack.c.bf16 %v1597, %v1593
        %v1678 = vpack.c.bf16 %v1598, %v1594
        %v1679 = vpack.c.bf16 %v1599, %v1595
        %v1680 = vpack.c.bf16 %v1604, %v1600
        %v1681 = vpack.c.bf16 %v1605, %v1601
        %v1682 = vpack.c.bf16 %v1606, %v1602
        %v1683 = vpack.c.bf16 %v1607, %v1603
        %v1684 = vpack.c.bf16 %v1612, %v1608
        %v1685 = vpack.c.bf16 %v1613, %v1609
        %v1686 = vpack.c.bf16 %v1614, %v1610
        %v1687 = vpack.c.bf16 %v1615, %v1611
        %v1688 = vpack.c.bf16 %v1620, %v1616
        %v1689 = vpack.c.bf16 %v1621, %v1617
        %v1690 = vpack.c.bf16 %v1622, %v1618
        %v1691 = vpack.c.bf16 %v1623, %v1619
        %v1692 = vpack.c.bf16 %v1628, %v1624
        %v1693 = vpack.c.bf16 %v1629, %v1625
        %v1694 = vpack.c.bf16 %v1630, %v1626
        %v1695 = vpack.c.bf16 %v1631, %v1627
        %v1696 = vld [vmem:[#allocation7] sm:$0xf]
        %v1697 = vld [vmem:[#allocation7 + $0x4] sm:$0xf]
        %v1698 = vld [vmem:[#allocation7 + $0x8] sm:$0xf]
        %v1699 = vld [vmem:[#allocation7 + $0xc] sm:$0xf]
        %v1700 = vld [vmem:[#allocation7 + $0x10] sm:$0xf]
        %v1701 = vld [vmem:[#allocation7 + $0x14] sm:$0xf]
        %v1702 = vld [vmem:[#allocation7 + $0x18] sm:$0xf]
        %v1703 = vld [vmem:[#allocation7 + $0x1c] sm:$0xf]
        %v1704 = vld [vmem:[#allocation7 + $0x20] sm:$0xf]
        %v1705 = vld [vmem:[#allocation7 + $0x24] sm:$0xf]
        %v1706 = vld [vmem:[#allocation7 + $0x28] sm:$0xf]
        %v1707 = vld [vmem:[#allocation7 + $0x2c] sm:$0xf]
        %v1708 = vld [vmem:[#allocation7 + $0x30] sm:$0xf]
        %v1709 = vld [vmem:[#allocation7 + $0x34] sm:$0xf]
        %v1710 = vld [vmem:[#allocation7 + $0x38] sm:$0xf]
        %v1711 = vld [vmem:[#allocation7 + $0x3c] sm:$0xf]
        %v1712 = vld [vmem:[#allocation7 + $0x40] sm:$0xf]
        %v1713 = vld [vmem:[#allocation7 + $0x44] sm:$0xf]
        %v1714 = vld [vmem:[#allocation7 + $0x48] sm:$0xf]
        %v1715 = vld [vmem:[#allocation7 + $0x4c] sm:$0xf]
        %v1716 = vld [vmem:[#allocation7 + $0x50] sm:$0xf]
        %v1717 = vld [vmem:[#allocation7 + $0x54] sm:$0xf]
        %v1718 = vld [vmem:[#allocation7 + $0x58] sm:$0xf]
        %v1719 = vld [vmem:[#allocation7 + $0x5c] sm:$0xf]
        %v1720 = vld [vmem:[#allocation7 + $0x60] sm:$0xf]
        %v1721 = vld [vmem:[#allocation7 + $0x64] sm:$0xf]
        %v1722 = vld [vmem:[#allocation7 + $0x68] sm:$0xf]
        %v1723 = vld [vmem:[#allocation7 + $0x6c] sm:$0xf]
        %v1724 = vld [vmem:[#allocation7 + $0x70] sm:$0xf]
        %v1725 = vld [vmem:[#allocation7 + $0x74] sm:$0xf]
        %v1726 = vld [vmem:[#allocation7 + $0x78] sm:$0xf]
        %v1727 = vld [vmem:[#allocation7 + $0x7c] sm:$0xf]
        %v1728 = vld [vmem:[#allocation7 + $0x80] sm:$0xf]
        %v1729 = vld [vmem:[#allocation7 + $0x84] sm:$0xf]
        %v1730 = vld [vmem:[#allocation7 + $0x88] sm:$0xf]
        %v1731 = vld [vmem:[#allocation7 + $0x8c] sm:$0xf]
        %v1732 = vld [vmem:[#allocation7 + $0x90] sm:$0xf]
        %v1733 = vld [vmem:[#allocation7 + $0x94] sm:$0xf]
        %v1734 = vld [vmem:[#allocation7 + $0x98] sm:$0xf]
        %v1735 = vld [vmem:[#allocation7 + $0x9c] sm:$0xf]
        %v1736 = vld [vmem:[#allocation7 + $0xa0] sm:$0xf]
        %v1737 = vld [vmem:[#allocation7 + $0xa4] sm:$0xf]
        %v1738 = vld [vmem:[#allocation7 + $0xa8] sm:$0xf]
        %v1739 = vld [vmem:[#allocation7 + $0xac] sm:$0xf]
        %v1740 = vld [vmem:[#allocation7 + $0xb0] sm:$0xf]
        %v1741 = vld [vmem:[#allocation7 + $0xb4] sm:$0xf]
        %v1742 = vld [vmem:[#allocation7 + $0xb8] sm:$0xf]
        %v1743 = vld [vmem:[#allocation7 + $0xbc] sm:$0xf]
        %v1744 = vld [vmem:[#allocation7 + $0xc0] sm:$0xf]
        %v1745 = vld [vmem:[#allocation7 + $0xc4] sm:$0xf]
        %v1746 = vld [vmem:[#allocation7 + $0xc8] sm:$0xf]
        %v1747 = vld [vmem:[#allocation7 + $0xcc] sm:$0xf]
        %v1748 = vld [vmem:[#allocation7 + $0xd0] sm:$0xf]
        %v1749 = vld [vmem:[#allocation7 + $0xd4] sm:$0xf]
        %v1750 = vld [vmem:[#allocation7 + $0xd8] sm:$0xf]
        %v1751 = vld [vmem:[#allocation7 + $0xdc] sm:$0xf]
        %v1752 = vld [vmem:[#allocation7 + $0xe0] sm:$0xf]
        %v1753 = vld [vmem:[#allocation7 + $0xe4] sm:$0xf]
        %v1754 = vld [vmem:[#allocation7 + $0xe8] sm:$0xf]
        %v1755 = vld [vmem:[#allocation7 + $0xec] sm:$0xf]
        %v1756 = vld [vmem:[#allocation7 + $0xf0] sm:$0xf]
        %v1757 = vld [vmem:[#allocation7 + $0xf4] sm:$0xf]
        %v1758 = vld [vmem:[#allocation7 + $0xf8] sm:$0xf]
        %v1759 = vld [vmem:[#allocation7 + $0xfc] sm:$0xf]
        %v1760 = vld [vmem:[%s6] sm:$0x1]
        %v1762 = vlaneseq
        %v1763 = vshrl.u32 %v1762, 7
        %v1764 = vsub.s32 0, %v1763
        %v1765 = vrot.slane %v1760, %v1764
        %v1831 = vunpack.c.l.b16 %v1696
        %v1832 = vunpack.c.l.b16 %v1697
        %v1833 = vunpack.c.l.b16 %v1698
        %v1834 = vunpack.c.l.b16 %v1699
        %v1835 = vunpack.c.l.b16 %v1700
        %v1836 = vunpack.c.l.b16 %v1701
        %v1837 = vunpack.c.l.b16 %v1702
        %v1838 = vunpack.c.l.b16 %v1703
        %v1839 = vunpack.c.l.b16 %v1704
        %v1840 = vunpack.c.l.b16 %v1705
        %v1841 = vunpack.c.l.b16 %v1706
        %v1842 = vunpack.c.l.b16 %v1707
        %v1843 = vunpack.c.l.b16 %v1708
        %v1844 = vunpack.c.l.b16 %v1709
        %v1845 = vunpack.c.l.b16 %v1710
        %v1846 = vunpack.c.l.b16 %v1711
        %v1847 = vunpack.c.l.b16 %v1712
        %v1848 = vunpack.c.l.b16 %v1713
        %v1849 = vunpack.c.l.b16 %v1714
        %v1850 = vunpack.c.l.b16 %v1715
        %v1851 = vunpack.c.l.b16 %v1716
        %v1852 = vunpack.c.l.b16 %v1717
        %v1853 = vunpack.c.l.b16 %v1718
        %v1854 = vunpack.c.l.b16 %v1719
        %v1855 = vunpack.c.l.b16 %v1720
        %v1856 = vunpack.c.l.b16 %v1721
        %v1857 = vunpack.c.l.b16 %v1722
        %v1858 = vunpack.c.l.b16 %v1723
        %v1859 = vunpack.c.l.b16 %v1724
        %v1860 = vunpack.c.l.b16 %v1725
        %v1861 = vunpack.c.l.b16 %v1726
        %v1862 = vunpack.c.l.b16 %v1727
        %v1863 = vunpack.c.l.b16 %v1728
        %v1864 = vunpack.c.l.b16 %v1729
        %v1865 = vunpack.c.l.b16 %v1730
        %v1866 = vunpack.c.l.b16 %v1731
        %v1867 = vunpack.c.l.b16 %v1732
        %v1868 = vunpack.c.l.b16 %v1733
        %v1869 = vunpack.c.l.b16 %v1734
        %v1870 = vunpack.c.l.b16 %v1735
        %v1871 = vunpack.c.l.b16 %v1736
        %v1872 = vunpack.c.l.b16 %v1737
        %v1873 = vunpack.c.l.b16 %v1738
        %v1874 = vunpack.c.l.b16 %v1739
        %v1875 = vunpack.c.l.b16 %v1740
        %v1876 = vunpack.c.l.b16 %v1741
        %v1877 = vunpack.c.l.b16 %v1742
        %v1878 = vunpack.c.l.b16 %v1743
        %v1879 = vunpack.c.l.b16 %v1744
        %v1880 = vunpack.c.l.b16 %v1745
        %v1881 = vunpack.c.l.b16 %v1746
        %v1882 = vunpack.c.l.b16 %v1747
        %v1883 = vunpack.c.l.b16 %v1748
        %v1884 = vunpack.c.l.b16 %v1749
        %v1885 = vunpack.c.l.b16 %v1750
        %v1886 = vunpack.c.l.b16 %v1751
        %v1887 = vunpack.c.l.b16 %v1752
        %v1888 = vunpack.c.l.b16 %v1753
        %v1889 = vunpack.c.l.b16 %v1754
        %v1890 = vunpack.c.l.b16 %v1755
        %v1891 = vunpack.c.l.b16 %v1756
        %v1892 = vunpack.c.l.b16 %v1757
        %v1893 = vunpack.c.l.b16 %v1758
        %v1894 = vunpack.c.l.b16 %v1759
        %v1895 = vpack.c.b16 %v1832, %v1831
        %v1896 = vpack.c.b16 %v1834, %v1833
        %v1897 = vpack.c.b16 %v1836, %v1835
        %v1898 = vpack.c.b16 %v1838, %v1837
        %v1899 = vpack.c.b16 %v1840, %v1839
        %v1900 = vpack.c.b16 %v1842, %v1841
        %v1901 = vpack.c.b16 %v1844, %v1843
        %v1902 = vpack.c.b16 %v1846, %v1845
        %v1903 = vpack.c.b16 %v1848, %v1847
        %v1904 = vpack.c.b16 %v1850, %v1849
        %v1905 = vpack.c.b16 %v1852, %v1851
        %v1906 = vpack.c.b16 %v1854, %v1853
        %v1907 = vpack.c.b16 %v1856, %v1855
        %v1908 = vpack.c.b16 %v1858, %v1857
        %v1909 = vpack.c.b16 %v1860, %v1859
        %v1910 = vpack.c.b16 %v1862, %v1861
        %v1911 = vpack.c.b16 %v1864, %v1863
        %v1912 = vpack.c.b16 %v1866, %v1865
        %v1913 = vpack.c.b16 %v1868, %v1867
        %v1914 = vpack.c.b16 %v1870, %v1869
        %v1915 = vpack.c.b16 %v1872, %v1871
        %v1916 = vpack.c.b16 %v1874, %v1873
        %v1917 = vpack.c.b16 %v1876, %v1875
        %v1918 = vpack.c.b16 %v1878, %v1877
        %v1919 = vpack.c.b16 %v1880, %v1879
        %v1920 = vpack.c.b16 %v1882, %v1881
        %v1921 = vpack.c.b16 %v1884, %v1883
        %v1922 = vpack.c.b16 %v1886, %v1885
        %v1923 = vpack.c.b16 %v1888, %v1887
        %v1924 = vpack.c.b16 %v1890, %v1889
        %v1925 = vpack.c.b16 %v1892, %v1891
        %v1926 = vpack.c.b16 %v1894, %v1893
        %1959 = vmatprep.subr.bf16.mxu0 0
        %1960 = vmatpush1.bf16.msra.mxu0 %v1902
        %1961 = vmatprep.subr.bf16.mxu0 0
        %1962 = vmatpush1.bf16.msra.mxu0 %v1901
        %1963 = vmatprep.subr.bf16.mxu0 0
        %1964 = vmatpush1.bf16.msra.mxu0 %v1900
        %1965 = vmatprep.subr.bf16.mxu0 0
        %1966 = vmatpush1.bf16.msra.mxu0 %v1899
        %1967 = vmatprep.subr.bf16.mxu0 0
        %1968 = vmatpush1.bf16.msra.mxu0 %v1898
        %1969 = vmatprep.subr.bf16.mxu0 0
        %1970 = vmatpush1.bf16.msra.mxu0 %v1897
        %1971 = vmatprep.subr.bf16.mxu0 0
        %1972 = vmatpush1.bf16.msra.mxu0 %v1896
        %1973 = vmatprep.subr.bf16.mxu0 0
        %1974 = vmatpush1.bf16.msra.mxu0 %v1895
        %1975 = vmatprep.subr.bf16.mxu0 0
        %1976 = vmatpush2.bf16.msra.mxu0 %v1910
        %1977 = vmatprep.subr.bf16.mxu0 0
        %1978 = vmatpush2.bf16.msra.mxu0 %v1909
        %1979 = vmatprep.subr.bf16.mxu0 0
        %1980 = vmatpush2.bf16.msra.mxu0 %v1908
        %1981 = vmatprep.subr.bf16.mxu0 0
        %1982 = vmatpush2.bf16.msra.mxu0 %v1907
        %1983 = vmatprep.subr.bf16.mxu0 0
        %1984 = vmatpush2.bf16.msra.mxu0 %v1906
        %1985 = vmatprep.subr.bf16.mxu0 0
        %1986 = vmatpush2.bf16.msra.mxu0 %v1905
        %1987 = vmatprep.subr.bf16.mxu0 0
        %1988 = vmatpush2.bf16.msra.mxu0 %v1904
        %1989 = vmatprep.subr.bf16.mxu0 0
        %1990 = vmatpush2.bf16.msra.mxu0 %v1903
        %1991 = vmatprep.mubr.bf16.mxu0 %v1633
        %1992 = vmatmul.mubr.bf16.gmra.mxu0 %v1632
        %v1993 = vpop.f32.mrf.mxu0
        %v1994 = vadd.f32 %v1765, %v1993
        %v1995 = vpop.f32.mrf.mxu0
        %v1996 = vpop.f32.mrf.mxu0
        %v1997 = vadd.f32 %v1765, %v1996
        %v1998 = vpop.f32.mrf.mxu0
        %1999 = vmatprep.mubr.bf16.mxu0 %v1637
        %2000 = vmatmul.mubr.bf16.gmra.mxu0 %v1636
        %v2001 = vpop.f32.mrf.mxu0
        %v2002 = vadd.f32 %v1765, %v2001
        %v2003 = vpop.f32.mrf.mxu0
        %v2004 = vpop.f32.mrf.mxu0
        %v2005 = vadd.f32 %v1765, %v2004
        %v2006 = vpop.f32.mrf.mxu0
        %2007 = vmatprep.mubr.bf16.mxu0 %v1641
        %2008 = vmatmul.mubr.bf16.gmra.mxu0 %v1640
        %v2009 = vpop.f32.mrf.mxu0
        %v2010 = vadd.f32 %v1765, %v2009
        %v2011 = vpop.f32.mrf.mxu0
        %v2012 = vpop.f32.mrf.mxu0
        %v2013 = vadd.f32 %v1765, %v2012
        %v2014 = vpop.f32.mrf.mxu0
        %2015 = vmatprep.mubr.bf16.mxu0 %v1645
        %2016 = vmatmul.mubr.bf16.gmra.mxu0 %v1644
        %v2017 = vpop.f32.mrf.mxu0
        %v2018 = vadd.f32 %v1765, %v2017
        %v2019 = vpop.f32.mrf.mxu0
        %v2020 = vpop.f32.mrf.mxu0
        %v2021 = vadd.f32 %v1765, %v2020
        %v2022 = vpop.f32.mrf.mxu0
        %2023 = vmatprep.mubr.bf16.mxu0 %v1649
        %2024 = vmatmul.mubr.bf16.gmra.mxu0 %v1648
        %v2025 = vpop.f32.mrf.mxu0
        %v2026 = vadd.f32 %v1765, %v2025
        %v2027 = vpop.f32.mrf.mxu0
        %v2028 = vpop.f32.mrf.mxu0
        %v2029 = vadd.f32 %v1765, %v2028
        %v2030 = vpop.f32.mrf.mxu0
        %2031 = vmatprep.mubr.bf16.mxu0 %v1653
        %2032 = vmatmul.mubr.bf16.gmra.mxu0 %v1652
        %v2033 = vpop.f32.mrf.mxu0
        %v2034 = vadd.f32 %v1765, %v2033
        %v2035 = vpop.f32.mrf.mxu0
        %v2036 = vpop.f32.mrf.mxu0
        %v2037 = vadd.f32 %v1765, %v2036
        %v2038 = vpop.f32.mrf.mxu0
        %2039 = vmatprep.mubr.bf16.mxu0 %v1657
        %2040 = vmatmul.mubr.bf16.gmra.mxu0 %v1656
        %v2041 = vpop.f32.mrf.mxu0
        %v2042 = vadd.f32 %v1765, %v2041
        %v2043 = vpop.f32.mrf.mxu0
        %v2044 = vpop.f32.mrf.mxu0
        %v2045 = vadd.f32 %v1765, %v2044
        %v2046 = vpop.f32.mrf.mxu0
        %2047 = vmatprep.mubr.bf16.mxu0 %v1661
        %2048 = vmatmul.mubr.bf16.gmra.mxu0 %v1660
        %v2049 = vpop.f32.mrf.mxu0
        %v2050 = vadd.f32 %v1765, %v2049
        %v2051 = vpop.f32.mrf.mxu0
        %v2052 = vpop.f32.mrf.mxu0
        %v2053 = vadd.f32 %v1765, %v2052
        %v2054 = vpop.f32.mrf.mxu0
        %2055 = vmatprep.mubr.bf16.mxu0 %v1665
        %2056 = vmatmul.mubr.bf16.gmra.mxu0 %v1664
        %v2057 = vpop.f32.mrf.mxu0
        %v2058 = vadd.f32 %v1765, %v2057
        %v2059 = vpop.f32.mrf.mxu0
        %v2060 = vpop.f32.mrf.mxu0
        %v2061 = vadd.f32 %v1765, %v2060
        %v2062 = vpop.f32.mrf.mxu0
        %2063 = vmatprep.mubr.bf16.mxu0 %v1669
        %2064 = vmatmul.mubr.bf16.gmra.mxu0 %v1668
        %v2065 = vpop.f32.mrf.mxu0
        %v2066 = vadd.f32 %v1765, %v2065
        %v2067 = vpop.f32.mrf.mxu0
        %v2068 = vpop.f32.mrf.mxu0
        %v2069 = vadd.f32 %v1765, %v2068
        %v2070 = vpop.f32.mrf.mxu0
        %2071 = vmatprep.mubr.bf16.mxu0 %v1673
        %2072 = vmatmul.mubr.bf16.gmra.mxu0 %v1672
        %v2073 = vpop.f32.mrf.mxu0
        %v2074 = vadd.f32 %v1765, %v2073
        %v2075 = vpop.f32.mrf.mxu0
        %v2076 = vpop.f32.mrf.mxu0
        %v2077 = vadd.f32 %v1765, %v2076
        %v2078 = vpop.f32.mrf.mxu0
        %2079 = vmatprep.mubr.bf16.mxu0 %v1677
        %2080 = vmatmul.mubr.bf16.gmra.mxu0 %v1676
        %v2081 = vpop.f32.mrf.mxu0
        %v2082 = vadd.f32 %v1765, %v2081
        %v2083 = vpop.f32.mrf.mxu0
        %v2084 = vpop.f32.mrf.mxu0
        %v2085 = vadd.f32 %v1765, %v2084
        %v2086 = vpop.f32.mrf.mxu0
        %2087 = vmatprep.mubr.bf16.mxu0 %v1681
        %2088 = vmatmul.mubr.bf16.gmra.mxu0 %v1680
        %v2089 = vpop.f32.mrf.mxu0
        %v2090 = vadd.f32 %v1765, %v2089
        %v2091 = vpop.f32.mrf.mxu0
        %v2092 = vpop.f32.mrf.mxu0
        %v2093 = vadd.f32 %v1765, %v2092
        %v2094 = vpop.f32.mrf.mxu0
        %2095 = vmatprep.mubr.bf16.mxu0 %v1685
        %2096 = vmatmul.mubr.bf16.gmra.mxu0 %v1684
        %v2097 = vpop.f32.mrf.mxu0
        %v2098 = vadd.f32 %v1765, %v2097
        %v2099 = vpop.f32.mrf.mxu0
        %v2100 = vpop.f32.mrf.mxu0
        %v2101 = vadd.f32 %v1765, %v2100
        %v2102 = vpop.f32.mrf.mxu0
        %2103 = vmatprep.mubr.bf16.mxu0 %v1689
        %2104 = vmatmul.mubr.bf16.gmra.mxu0 %v1688
        %v2105 = vpop.f32.mrf.mxu0
        %v2106 = vadd.f32 %v1765, %v2105
        %v2107 = vpop.f32.mrf.mxu0
        %v2108 = vpop.f32.mrf.mxu0
        %v2109 = vadd.f32 %v1765, %v2108
        %v2110 = vpop.f32.mrf.mxu0
        %2111 = vmatprep.mubr.bf16.mxu0 %v1693
        %2112 = vmatmul.mubr.bf16.gmra.mxu0 %v1692
        %v2113 = vpop.f32.mrf.mxu0
        %v2114 = vadd.f32 %v1765, %v2113
        %v2115 = vpop.f32.mrf.mxu0
        %v2116 = vpop.f32.mrf.mxu0
        %v2117 = vadd.f32 %v1765, %v2116
        %v2118 = vpop.f32.mrf.mxu0
        %2119 = vdwg.mxu0
        %2120 = vmatprep.subr.bf16.mxu0 0
        %2121 = vmatpush1.bf16.msra.mxu0 %v1918
        %2122 = vmatprep.subr.bf16.mxu0 0
        %2123 = vmatpush1.bf16.msra.mxu0 %v1917
        %2124 = vmatprep.subr.bf16.mxu0 0
        %2125 = vmatpush1.bf16.msra.mxu0 %v1916
        %2126 = vmatprep.subr.bf16.mxu0 0
        %2127 = vmatpush1.bf16.msra.mxu0 %v1915
        %2128 = vmatprep.subr.bf16.mxu0 0
        %2129 = vmatpush1.bf16.msra.mxu0 %v1914
        %2130 = vmatprep.subr.bf16.mxu0 0
        %2131 = vmatpush1.bf16.msra.mxu0 %v1913
        %2132 = vmatprep.subr.bf16.mxu0 0
        %2133 = vmatpush1.bf16.msra.mxu0 %v1912
        %2134 = vmatprep.subr.bf16.mxu0 0
        %2135 = vmatpush1.bf16.msra.mxu0 %v1911
        %2136 = vmatprep.subr.bf16.mxu0 0
        %2137 = vmatpush2.bf16.msra.mxu0 %v1926
        %2138 = vmatprep.subr.bf16.mxu0 0
        %2139 = vmatpush2.bf16.msra.mxu0 %v1925
        %2140 = vmatprep.subr.bf16.mxu0 0
        %2141 = vmatpush2.bf16.msra.mxu0 %v1924
        %2142 = vmatprep.subr.bf16.mxu0 0
        %2143 = vmatpush2.bf16.msra.mxu0 %v1923
        %2144 = vmatprep.subr.bf16.mxu0 0
        %2145 = vmatpush2.bf16.msra.mxu0 %v1922
        %2146 = vmatprep.subr.bf16.mxu0 0
        %2147 = vmatpush2.bf16.msra.mxu0 %v1921
        %2148 = vmatprep.subr.bf16.mxu0 0
        %2149 = vmatpush2.bf16.msra.mxu0 %v1920
        %2150 = vmatprep.subr.bf16.mxu0 0
        %2151 = vmatpush2.bf16.msra.mxu0 %v1919
        %2152 = vmatprep.mubr.bf16.mxu0 %v1635
        %2153 = vmatmul.mubr.bf16.gmra.mxu0 %v1634
        %v2154 = vpop.f32.mrf.mxu0
        %v2155 = vadd.f32 %v1994, %v2154
        %v2156 = vpop.f32.mrf.mxu0
        %v2157 = vpop.f32.mrf.mxu0
        %v2158 = vadd.f32 %v1997, %v2157
        %v2159 = vpop.f32.mrf.mxu0
        %2160 = vmatprep.mubr.bf16.mxu0 %v1639
        %2161 = vmatmul.mubr.bf16.gmra.mxu0 %v1638
        %v2162 = vpop.f32.mrf.mxu0
        %v2163 = vadd.f32 %v2002, %v2162
        %v2164 = vpop.f32.mrf.mxu0
        %v2165 = vpop.f32.mrf.mxu0
        %v2166 = vadd.f32 %v2005, %v2165
        %v2167 = vpop.f32.mrf.mxu0
        %2168 = vmatprep.mubr.bf16.mxu0 %v1643
        %2169 = vmatmul.mubr.bf16.gmra.mxu0 %v1642
        %v2170 = vpop.f32.mrf.mxu0
        %v2171 = vadd.f32 %v2010, %v2170
        %v2172 = vpop.f32.mrf.mxu0
        %v2173 = vpop.f32.mrf.mxu0
        %v2174 = vadd.f32 %v2013, %v2173
        %v2175 = vpop.f32.mrf.mxu0
        %2176 = vmatprep.mubr.bf16.mxu0 %v1647
        %2177 = vmatmul.mubr.bf16.gmra.mxu0 %v1646
        %v2178 = vpop.f32.mrf.mxu0
        %v2179 = vadd.f32 %v2018, %v2178
        %v2180 = vpop.f32.mrf.mxu0
        %v2181 = vpop.f32.mrf.mxu0
        %v2182 = vadd.f32 %v2021, %v2181
        %v2183 = vpop.f32.mrf.mxu0
        %2184 = vmatprep.mubr.bf16.mxu0 %v1651
        %2185 = vmatmul.mubr.bf16.gmra.mxu0 %v1650
        %v2186 = vpop.f32.mrf.mxu0
        %v2187 = vadd.f32 %v2026, %v2186
        %v2188 = vpop.f32.mrf.mxu0
        %v2189 = vpop.f32.mrf.mxu0
        %v2190 = vadd.f32 %v2029, %v2189
        %v2191 = vpop.f32.mrf.mxu0
        %2192 = vmatprep.mubr.bf16.mxu0 %v1655
        %2193 = vmatmul.mubr.bf16.gmra.mxu0 %v1654
        %v2194 = vpop.f32.mrf.mxu0
        %v2195 = vadd.f32 %v2034, %v2194
        %v2196 = vpop.f32.mrf.mxu0
        %v2197 = vpop.f32.mrf.mxu0
        %v2198 = vadd.f32 %v2037, %v2197
        %v2199 = vpop.f32.mrf.mxu0
        %2200 = vmatprep.mubr.bf16.mxu0 %v1659
        %2201 = vmatmul.mubr.bf16.gmra.mxu0 %v1658
        %v2202 = vpop.f32.mrf.mxu0
        %v2203 = vadd.f32 %v2042, %v2202
        %v2204 = vpop.f32.mrf.mxu0
        %v2205 = vpop.f32.mrf.mxu0
        %v2206 = vadd.f32 %v2045, %v2205
        %v2207 = vpop.f32.mrf.mxu0
        %2208 = vmatprep.mubr.bf16.mxu0 %v1663
        %2209 = vmatmul.mubr.bf16.gmra.mxu0 %v1662
        %v2210 = vpop.f32.mrf.mxu0
        %v2211 = vadd.f32 %v2050, %v2210
        %v2212 = vpop.f32.mrf.mxu0
        %v2213 = vpop.f32.mrf.mxu0
        %v2214 = vadd.f32 %v2053, %v2213
        %v2215 = vpop.f32.mrf.mxu0
        %2216 = vmatprep.mubr.bf16.mxu0 %v1667
        %2217 = vmatmul.mubr.bf16.gmra.mxu0 %v1666
        %v2218 = vpop.f32.mrf.mxu0
        %v2219 = vadd.f32 %v2058, %v2218
        %v2220 = vpop.f32.mrf.mxu0
        %v2221 = vpop.f32.mrf.mxu0
        %v2222 = vadd.f32 %v2061, %v2221
        %v2223 = vpop.f32.mrf.mxu0
        %2224 = vmatprep.mubr.bf16.mxu0 %v1671
        %2225 = vmatmul.mubr.bf16.gmra.mxu0 %v1670
        %v2226 = vpop.f32.mrf.mxu0
        %v2227 = vadd.f32 %v2066, %v2226
        %v2228 = vpop.f32.mrf.mxu0
        %v2229 = vpop.f32.mrf.mxu0
        %v2230 = vadd.f32 %v2069, %v2229
        %v2231 = vpop.f32.mrf.mxu0
        %2232 = vmatprep.mubr.bf16.mxu0 %v1675
        %2233 = vmatmul.mubr.bf16.gmra.mxu0 %v1674
        %v2234 = vpop.f32.mrf.mxu0
        %v2235 = vadd.f32 %v2074, %v2234
        %v2236 = vpop.f32.mrf.mxu0
        %v2237 = vpop.f32.mrf.mxu0
        %v2238 = vadd.f32 %v2077, %v2237
        %v2239 = vpop.f32.mrf.mxu0
        %2240 = vmatprep.mubr.bf16.mxu0 %v1679
        %2241 = vmatmul.mubr.bf16.gmra.mxu0 %v1678
        %v2242 = vpop.f32.mrf.mxu0
        %v2243 = vadd.f32 %v2082, %v2242
        %v2244 = vpop.f32.mrf.mxu0
        %v2245 = vpop.f32.mrf.mxu0
        %v2246 = vadd.f32 %v2085, %v2245
        %v2247 = vpop.f32.mrf.mxu0
        %2248 = vmatprep.mubr.bf16.mxu0 %v1683
        %2249 = vmatmul.mubr.bf16.gmra.mxu0 %v1682
        %v2250 = vpop.f32.mrf.mxu0
        %v2251 = vadd.f32 %v2090, %v2250
        %v2252 = vpop.f32.mrf.mxu0
        %v2253 = vpop.f32.mrf.mxu0
        %v2254 = vadd.f32 %v2093, %v2253
        %v2255 = vpop.f32.mrf.mxu0
        %2256 = vmatprep.mubr.bf16.mxu0 %v1687
        %2257 = vmatmul.mubr.bf16.gmra.mxu0 %v1686
        %v2258 = vpop.f32.mrf.mxu0
        %v2259 = vadd.f32 %v2098, %v2258
        %v2260 = vpop.f32.mrf.mxu0
        %v2261 = vpop.f32.mrf.mxu0
        %v2262 = vadd.f32 %v2101, %v2261
        %v2263 = vpop.f32.mrf.mxu0
        %2264 = vmatprep.mubr.bf16.mxu0 %v1691
        %2265 = vmatmul.mubr.bf16.gmra.mxu0 %v1690
        %v2266 = vpop.f32.mrf.mxu0
        %v2267 = vadd.f32 %v2106, %v2266
        %v2268 = vpop.f32.mrf.mxu0
        %v2269 = vpop.f32.mrf.mxu0
        %v2270 = vadd.f32 %v2109, %v2269
        %v2271 = vpop.f32.mrf.mxu0
        %2272 = vmatprep.mubr.bf16.mxu0 %v1695
        %2273 = vmatmul.mubr.bf16.gmra.mxu0 %v1694
        %v2274 = vpop.f32.mrf.mxu0
        %v2275 = vadd.f32 %v2114, %v2274
        %v2276 = vpop.f32.mrf.mxu0
        %v2277 = vpop.f32.mrf.mxu0
        %v2278 = vadd.f32 %v2117, %v2277
        %v2279 = vpop.f32.mrf.mxu0
        %2280 = vdwg.mxu0
        %v2281 = vadd.f32 %v2155, %v329
        %v2282 = vadd.f32 %v2158, %v330
        %v2283 = vadd.f32 %v2163, %v331
        %v2284 = vadd.f32 %v2166, %v332
        %v2285 = vadd.f32 %v2171, %v333
        %v2286 = vadd.f32 %v2174, %v334
        %v2287 = vadd.f32 %v2179, %v335
        %v2288 = vadd.f32 %v2182, %v336
        %v2289 = vadd.f32 %v2187, %v337
        %v2290 = vadd.f32 %v2190, %v338
        %v2291 = vadd.f32 %v2195, %v339
        %v2292 = vadd.f32 %v2198, %v340
        %v2293 = vadd.f32 %v2203, %v341
        %v2294 = vadd.f32 %v2206, %v342
        %v2295 = vadd.f32 %v2211, %v343
        %v2296 = vadd.f32 %v2214, %v344
        %v2297 = vadd.f32 %v2219, %v345
        %v2298 = vadd.f32 %v2222, %v346
        %v2299 = vadd.f32 %v2227, %v347
        %v2300 = vadd.f32 %v2230, %v348
        %v2301 = vadd.f32 %v2235, %v349
        %v2302 = vadd.f32 %v2238, %v350
        %v2303 = vadd.f32 %v2243, %v351
        %v2304 = vadd.f32 %v2246, %v352
        %v2305 = vadd.f32 %v2251, %v353
        %v2306 = vadd.f32 %v2254, %v354
        %v2307 = vadd.f32 %v2259, %v355
        %v2308 = vadd.f32 %v2262, %v356
        %v2309 = vadd.f32 %v2267, %v357
        %v2310 = vadd.f32 %v2270, %v358
        %v2311 = vadd.f32 %v2275, %v359
        %v2312 = vadd.f32 %v2278, %v360
        %2313 = vst [vmem:[%s325] sm:$0xff] %v2281
        %2314 = vst [vmem:[%s325 + $0x8] sm:$0xff] %v2282
        %2315 = vst [vmem:[%s325 + $0x10] sm:$0xff] %v2283
        %2316 = vst [vmem:[%s325 + $0x18] sm:$0xff] %v2284
        %2317 = vst [vmem:[%s325 + $0x20] sm:$0xff] %v2285
        %2318 = vst [vmem:[%s325 + $0x28] sm:$0xff] %v2286
        %2319 = vst [vmem:[%s325 + $0x30] sm:$0xff] %v2287
        %2320 = vst [vmem:[%s325 + $0x38] sm:$0xff] %v2288
        %2321 = vst [vmem:[%s325 + $0x40] sm:$0xff] %v2289
        %2322 = vst [vmem:[%s325 + $0x48] sm:$0xff] %v2290
        %2323 = vst [vmem:[%s325 + $0x50] sm:$0xff] %v2291
        %2324 = vst [vmem:[%s325 + $0x58] sm:$0xff] %v2292
        %2325 = vst [vmem:[%s325 + $0x60] sm:$0xff] %v2293
        %2326 = vst [vmem:[%s325 + $0x68] sm:$0xff] %v2294
        %2327 = vst [vmem:[%s325 + $0x70] sm:$0xff] %v2295
        %2328 = vst [vmem:[%s325 + $0x78] sm:$0xff] %v2296
        %2329 = vst [vmem:[%s325 + $0x80] sm:$0xff] %v2297
        %2330 = vst [vmem:[%s325 + $0x88] sm:$0xff] %v2298
        %2331 = vst [vmem:[%s325 + $0x90] sm:$0xff] %v2299
        %2332 = vst [vmem:[%s325 + $0x98] sm:$0xff] %v2300
        %2333 = vst [vmem:[%s325 + $0xa0] sm:$0xff] %v2301
        %2334 = vst [vmem:[%s325 + $0xa8] sm:$0xff] %v2302
        %2335 = vst [vmem:[%s325 + $0xb0] sm:$0xff] %v2303
        %2336 = vst [vmem:[%s325 + $0xb8] sm:$0xff] %v2304
        %2337 = vst [vmem:[%s325 + $0xc0] sm:$0xff] %v2305
        %2338 = vst [vmem:[%s325 + $0xc8] sm:$0xff] %v2306
        %2339 = vst [vmem:[%s325 + $0xd0] sm:$0xff] %v2307
        %2340 = vst [vmem:[%s325 + $0xd8] sm:$0xff] %v2308
        %2341 = vst [vmem:[%s325 + $0xe0] sm:$0xff] %v2309
        %2342 = vst [vmem:[%s325 + $0xe8] sm:$0xff] %v2310
        %2343 = vst [vmem:[%s325 + $0xf0] sm:$0xff] %v2311
        %2344 = vst [vmem:[%s325 + $0xf8] sm:$0xff] %v2312
        %s2345 = sand.u32 %s185, 1
        %s2346 = scalar_lea.sflag [#allocation4], %s2345
        %s2347 = sand.u32 %s185, 1
        %s2348 = smul.addr %s2347, 256
        %s2349 = scalar_lea.vmem [#allocation8], %s2348
        // Predicated region
        $region61: #{tpu_custom_call.1} parent=47 // pred_check
          %p2350 = pneg %p195
        $region62: #{tpu_custom_call.1} parent=47 // pred_check_branch
          %2352 = sbr.rel (%p2350) target = $region64
        $region63: #{tpu_custom_call.1} parent=47 // pred_region
          %s2353 = smul.u32 32, %s25
          %s2355 = ssub.s32 4096, 4096
          %2356 = vsyncadd %s2346, %s2355
          %s2357 = smul.addr %s2353, 128
          %s2358 = scalar_lea.hbm %s7, %s2357
          %s2359 = sshll.u32 %s2349, 4
          %s2360 = int_to_ptr.vmem [resolvable:$true] %s2359
          %2365 = dma.vmem_to_hbm [thread:$0]  %s2360, 4096, %s2358, %s2346, 128, 128, 8
        $region64: #{tpu_custom_call.1} parent=47 // pred_fallthru
          _
      $region48: #{tpu_custom_call.1} parent=5 // pred_fallthru
        _
      %p2366 = scmp.le.s32.totalorder 2, %s20
      // Predicated region
      $region65: #{tpu_custom_call.1} parent=5 // pred_check
        %p2367 = pneg %p2366
      $region66: #{tpu_custom_call.1} parent=5 // pred_check_branch
        %2369 = sbr.rel (%p2367) target = $region68
      $region67: #{tpu_custom_call.1} parent=5 // pred_region
        %s2370 = ssub.s32 %s20, 2
        // Predicated region
        $region69: #{tpu_custom_call.1} parent=67 // pred_check
          %p2371 = pneg %p201
        $region70: #{tpu_custom_call.1} parent=67 // pred_check_branch
          %2373 = sbr.rel (%p2371) target = $region72
        $region71: #{tpu_custom_call.1} parent=67 // pred_region
          %s2374 = sand.u32 %s186, 1
          %s2375 = scalar_lea.sflag [#allocation4], %s2374
          %s2376 = sand.u32 %s186, 1
          %s2377 = smul.addr %s2376, 256
          %s2378 = scalar_lea.vmem [#allocation8], %s2377
          %2379 = dma.done %s2375, 4096
        $region72: #{tpu_custom_call.1} parent=67 // pred_fallthru
          _
      $region68: #{tpu_custom_call.1} parent=5 // pred_fallthru
        _
    $region6: #{tpu_custom_call.1} parent=1 // loop_footer
      %s24 = sadd.s32 1, %s20
    $region7: #{tpu_custom_call.1} parent=1 // loop_footer_branch
      %19 = sbr.rel target = $region3
    $region8: #{tpu_custom_call.1} parent=1 // loop_exit
      _
    %2380 = vsyncpa [#allocation3], 1
    %s2381 = scalar_lea.sflag [#allocation3], 1
    %2382 = vsyncpa %s2381, 1
    %2383 = vsyncpa [#allocation6], 1
    %2384 = vsyncpa [#allocation4], 1
    %s2385 = scalar_lea.sflag [#allocation4], 1
    %2386 = vsyncpa %s2385, 1

</llo_original>
